<compile_context>
chip_gen: v7x
topology: tpu7x:2x2x1
jax: 0.10.0
libtpu: 0.0.40
codegen_flags: <defaults>
</compile_context>

<pallas_src>
import functools

import jax
import jax.numpy as jnp
from jax import lax
from jax.experimental import pallas as pl
from jax.experimental.pallas import tpu as pltpu

EPS = 1e-5
VMEM_LIMIT = 64 * 1024 * 1024


def _pick_conv_grid(m):
  """Return (num_slices, row_tile, steps_per_slice) with nc*tm*steps == m."""
  for tm in (1024, 512, 256):          # prefer a 2-way split (v7x megacore)
    if m % (2 * tm) == 0:
      return 2, tm, m // (2 * tm)
  for tm in (1024, 512, 256, 128, 64, 32, 16, 8):
    if m % tm == 0:
      return 1, tm, m // tm
  return 1, m, 1


def _pick_row_tile(m):
  for tm in (1024, 512, 256):          # prefer >=2 steps so v7x can split
    if m % (2 * tm) == 0:
      return tm
  for tm in (1024, 512, 256, 128, 64, 32, 16, 8):
    if m % tm == 0:
      return tm
  return m


def conv_stats_kernel(patches_ref, w_ref, y_ref, stats_ref):
  """Fused conv3x3+conv1x1 matmul; accumulates per-channel sum / sum-of-squares
  in f32 for the batch-norm statistics (per core-slice accumulator)."""
  y = jnp.dot(patches_ref[...], w_ref[...],
              preferred_element_type=jnp.float32)        # (TM, 2*C2) f32
  y_ref[...] = y.astype(y_ref.dtype)                     # bf16 intermediate

  @pl.when(pl.program_id(1) == 0)
  def _():
    stats_ref[...] = jnp.zeros_like(stats_ref)

  s = jnp.sum(y, axis=0, keepdims=True)                  # (1, 2*C2)
  q = jnp.sum(y * y, axis=0, keepdims=True)              # (1, 2*C2)
  stats_ref[...] += jnp.concatenate([s, q], axis=0)[None, :, :]


def bn_act_kernel(c2, y_ref, ss_ref, o_ref):
  """Per-channel affine BN (precomputed scale/shift) on both branches,
  branch sum, SiLU."""
  y = y_ref[...].astype(jnp.float32)                     # (TM, 2*C2)
  t = y * ss_ref[0:1, :] + ss_ref[1:2, :]
  z = t[:, :c2] + t[:, c2:]                              # add the two branches
  o_ref[...] = z * pl.reciprocal(1.0 + jnp.exp(-z), approx=True)   # SiLU


@jax.jit
def repconv_forward(x_nchw, w3_hwio, w1_io, gamma1, beta1, gamma2, beta2):
  N, C1, H, W = x_nchw.shape
  C2 = w3_hwio.shape[-1]
  K9 = 9 * C1
  M = N * H * W

  # --- layout glue (plain JAX): NCHW -> NHWC, pad, im2col, bf16 cast ---
  x = jnp.transpose(x_nchw, (0, 2, 3, 1)).astype(jnp.float32)
  xp = jnp.pad(x, ((0, 0), (1, 1), (1, 1), (0, 0)))
  # feature order (dy, dx, cin) matches the (3,3,C1,C2) -> (9*C1,C2) reshape.
  patches = jnp.concatenate(
      [xp[:, dy:dy + H, dx:dx + W, :] for dy in range(3) for dx in range(3)],
      axis=-1).reshape(M, K9).astype(jnp.bfloat16)

  # Fused weight (K9, 2*C2): cols [:C2] = 3x3 kernel; cols [C2:] = 1x1 kernel
  # placed in the centre-tap rows (dy=dx=1 -> rows [4*C1, 5*C1)).
  w9 = w3_hwio.reshape(K9, C2).astype(jnp.float32)
  w1pad = jnp.zeros((K9, C2), jnp.float32).at[4 * C1:5 * C1, :].set(
      w1_io.astype(jnp.float32))
  w_fused = jnp.concatenate([w9, w1pad], axis=1).astype(jnp.bfloat16)

  # --- pass 1: fused conv matmul + BN statistics ---
  NC, TM1, S = _pick_conv_grid(M)

  y, stats_partial = pl.pallas_call(
      conv_stats_kernel,
      out_shape=(jax.ShapeDtypeStruct((M, 2 * C2), jnp.bfloat16),
                 jax.ShapeDtypeStruct((NC, 2, 2 * C2), jnp.float32)),
      grid_spec=pltpu.PrefetchScalarGridSpec(
          num_scalar_prefetch=0,
          grid=(NC, S),
          in_specs=[
              pl.BlockSpec((TM1, K9), lambda c, i, S=S: (c * S + i, 0)),
              pl.BlockSpec((K9, 2 * C2), lambda c, i: (0, 0)),
          ],
          out_specs=[
              pl.BlockSpec((TM1, 2 * C2), lambda c, i, S=S: (c * S + i, 0)),
              pl.BlockSpec((1, 2, 2 * C2), lambda c, i: (c, 0, 0)),  # resident
          ]),
      compiler_params=pltpu.CompilerParams(
          dimension_semantics=("parallel", "arbitrary"),
          vmem_limit_bytes=VMEM_LIMIT),
  )(patches, w_fused)

  # --- BN statistics -> per-channel affine (tiny glue) ---
  stats = jnp.sum(stats_partial, axis=0)                 # (2, 2*C2)
  cnt = jnp.float32(M)
  mean = stats[0] / cnt
  # E[y^2]-E[y]^2 accumulated in f32; clamp tiny negatives from cancellation.
  var = jnp.maximum(stats[1] / cnt - mean * mean, 0.0)   # biased (training BN)
  gamma = jnp.concatenate([gamma1, gamma2]).astype(jnp.float32)
  beta = jnp.concatenate([beta1, beta2]).astype(jnp.float32)
  scale = gamma / jnp.sqrt(var + EPS)
  shift = beta - mean * scale
  ss = jnp.stack([scale, shift], axis=0)                 # (2, 2*C2)

  # --- pass 2: BN affine + branch sum + SiLU ---
  TM2 = _pick_row_tile(M)

  out = pl.pallas_call(
      functools.partial(bn_act_kernel, C2),
      out_shape=jax.ShapeDtypeStruct((M, C2), jnp.float32),
      grid_spec=pltpu.PrefetchScalarGridSpec(
          num_scalar_prefetch=0,
          grid=(M // TM2,),
          in_specs=[
              pl.BlockSpec((TM2, 2 * C2), lambda i: (i, 0)),
              pl.BlockSpec((2, 2 * C2), lambda i: (0, 0)),
          ],
          out_specs=pl.BlockSpec((TM2, C2), lambda i: (i, 0))),
      compiler_params=pltpu.CompilerParams(
          dimension_semantics=("parallel",),
          vmem_limit_bytes=VMEM_LIMIT),
  )(y, ss)

  out = out.reshape(N, H, W, C2)
  return jnp.transpose(out, (0, 3, 1, 2))                # back to NCHW


def reference_forward(x_nchw, w3_hwio, w1_io, gamma1, beta1, gamma2, beta2):
  """Pure-JAX reference mirroring the PyTorch training-mode forward."""
  w3_oihw = jnp.transpose(w3_hwio, (3, 2, 0, 1))
  y1 = lax.conv_general_dilated(
      x_nchw, w3_oihw, (1, 1), ((1, 1), (1, 1)),
      dimension_numbers=("NCHW", "OIHW", "NCHW"))
  w1_oihw = jnp.transpose(w1_io, (1, 0))[:, :, None, None]
  y2 = lax.conv_general_dilated(
      x_nchw, w1_oihw, (1, 1), ((0, 0), (0, 0)),
      dimension_numbers=("NCHW", "OIHW", "NCHW"))

  def bn(y, g, b):
    m = y.mean(axis=(0, 2, 3), keepdims=True)
    v = ((y - m) ** 2).mean(axis=(0, 2, 3), keepdims=True)
    return (g[None, :, None, None] * (y - m) / jnp.sqrt(v + EPS)
            + b[None, :, None, None])

  z = bn(y1, gamma1, beta1) + bn(y2, gamma2, beta2)
  return z * jax.nn.sigmoid(z)


if __name__ == "__main__":
  # RepConv(c1=4, c2=8, k=3, s=1, p=1), training-mode forward.
  N, C1, C2, H, W = 2, 4, 8, 16, 16

  key = jax.random.PRNGKey(0)
  kx, k3, k1 = jax.random.split(key, 3)
  x = jax.random.normal(kx, (N, C1, H, W), dtype=jnp.float32)
  # Deterministic parameter init (shapes from the module's __init__).
  w3 = jax.random.normal(k3, (3, 3, C1, C2), dtype=jnp.float32) * 0.1  # HWIO
  w1 = jax.random.normal(k1, (C1, C2), dtype=jnp.float32) * 0.1        # IO (1x1)
  gamma1 = jnp.ones((C2,), jnp.float32)
  beta1 = jnp.zeros((C2,), jnp.float32)
  gamma2 = jnp.ones((C2,), jnp.float32)
  beta2 = jnp.zeros((C2,), jnp.float32)

  out = repconv_forward(x, w3, w1, gamma1, beta1, gamma2, beta2)
  out = jax.block_until_ready(out)

  ref = reference_forward(x, w3, w1, gamma1, beta1, gamma2, beta2)
  assert out.shape == (N, C2, H, W)
  # bf16 patches / intermediates -> compare with loose-but-meaningful tolerance.
  assert jnp.allclose(out, ref, rtol=2e-2, atol=2e-2), "mismatch vs reference"

  print("KERNEL_OK")
</pallas_src>

<mosaic_0001>
module attributes {stable_mosaic.version = 11 : i64} {
  func.func @conv_stats_kernel(%arg0: i32, %arg1: i32, %arg2: memref<256x36xbf16, #tpu.memory_space<vmem>>, %arg3: memref<36x16xbf16, #tpu.memory_space<vmem>>, %arg4: memref<256x16xbf16, #tpu.memory_space<vmem>>, %arg5: memref<1x2x16xf32, #tpu.memory_space<vmem>>) attributes {dimension_semantics = [#tpu.dimension_semantics<parallel>, #tpu.dimension_semantics<arbitrary>], iteration_bounds = array<i64: 2, 1>, scalar_prefetch = 0 : i64, scratch_operands = 0 : i64, tpu.core_type = #tpu.core_type<tc>, window_params = [{transform_indices = @transform_0, window_bounds = array<i64: 256, 36>}, {pipeline_mode = #tpu.pipeline_mode<synchronous>, transform_indices = @transform_1, window_bounds = array<i64: 36, 16>}, {transform_indices = @transform_2, window_bounds = array<i64: 256, 16>}, {transform_indices = @transform_3, window_bounds = array<i64: 1, 2, 16>}]} {
    %c0 = arith.constant 0 : index
    %c0_0 = arith.constant 0 : index
    %0 = vector.load %arg2[%c0, %c0_0] : memref<256x36xbf16, #tpu.memory_space<vmem>>, vector<256x36xbf16>
    %c0_1 = arith.constant 0 : index
    %c0_2 = arith.constant 0 : index
    %1 = vector.load %arg3[%c0_1, %c0_2] : memref<36x16xbf16, #tpu.memory_space<vmem>>, vector<36x16xbf16>
    %cst = arith.constant dense<0.000000e+00> : vector<256x16xf32>
    %2 = tpu.matmul %0, %1, %cst {dimension_numbers = #tpu.dot_dimension_numbers<[1], [0], [0], [1], [0, 0, 1, 1], [], []>} : vector<256x36xbf16>, vector<36x16xbf16>, vector<256x16xf32> -> vector<256x16xf32>
    %3 = arith.truncf %2 : vector<256x16xf32> to vector<256x16xbf16>
    %c0_3 = arith.constant 0 : index
    %c0_4 = arith.constant 0 : index
    %4 = vector.load %arg4[%c0_3, %c0_4] : memref<256x16xbf16, #tpu.memory_space<vmem>>, vector<256x16xbf16>
    tpu.vector_store %arg4[%c0_3, %c0_4], %3 {strides = array<i32>} : memref<256x16xbf16, #tpu.memory_space<vmem>>, vector<256x16xbf16>,
    %c0_i32 = arith.constant 0 : i32
    %5 = arith.cmpi eq, %arg1, %c0_i32 : i32
    %6 = arith.extui %5 : i1 to i32
    %c0_i32_5 = arith.constant 0 : i32
    %7 = arith.cmpi ne, %6, %c0_i32_5 : i32
    scf.if %7 {
      %cst_14 = arith.constant 0.000000e+00 : f32
      %18 = vector.broadcast %cst_14 : f32 to vector<1x2x16xf32>
      %c0_15 = arith.constant 0 : index
      %c0_16 = arith.constant 0 : index
      %c0_17 = arith.constant 0 : index
      %19 = vector.load %arg5[%c0_15, %c0_16, %c0_17] : memref<1x2x16xf32, #tpu.memory_space<vmem>>, vector<1x2x16xf32>
      tpu.vector_store %arg5[%c0_15, %c0_16, %c0_17], %18 {strides = array<i32>} : memref<1x2x16xf32, #tpu.memory_space<vmem>>, vector<1x2x16xf32>,
    } else {
    }
    %cst_6 = arith.constant dense<0.000000e+00> : vector<16xf32>
    %8 = vector.multi_reduction <add>, %2, %cst_6 [0] : vector<256x16xf32> to vector<16xf32>
    %9 = vector.shape_cast %8 : vector<16xf32> to vector<1x16xf32>
    %10 = arith.mulf %2, %2 : vector<256x16xf32>
    %cst_7 = arith.constant dense<0.000000e+00> : vector<16xf32>
    %11 = vector.multi_reduction <add>, %10, %cst_7 [0] : vector<256x16xf32> to vector<16xf32>
    %12 = vector.shape_cast %11 : vector<16xf32> to vector<1x16xf32>
    %c0_8 = arith.constant 0 : index
    %c0_9 = arith.constant 0 : index
    %c0_10 = arith.constant 0 : index
    %13 = vector.load %arg5[%c0_8, %c0_9, %c0_10] : memref<1x2x16xf32, #tpu.memory_space<vmem>>, vector<1x2x16xf32>
    %14 = tpu.concatenate %9, %12 in 0 : vector<1x16xf32>, vector<1x16xf32> -> vector<2x16xf32>
    %15 = vector.shape_cast %14 : vector<2x16xf32> to vector<1x2x16xf32>
    %16 = arith.addf %13, %15 : vector<1x2x16xf32>
    %c0_11 = arith.constant 0 : index
    %c0_12 = arith.constant 0 : index
    %c0_13 = arith.constant 0 : index
    %17 = vector.load %arg5[%c0_11, %c0_12, %c0_13] : memref<1x2x16xf32, #tpu.memory_space<vmem>>, vector<1x2x16xf32>
    tpu.vector_store %arg5[%c0_11, %c0_12, %c0_13], %16 {strides = array<i32>} : memref<1x2x16xf32, #tpu.memory_space<vmem>>, vector<1x2x16xf32>,
    return
  }
  func.func @transform_0(%arg0: i32, %arg1: i32) -> (i32, i32) {
    %c1_i32 = arith.constant 1 : i32
    %0 = arith.muli %arg0, %c1_i32 : i32
    %1 = arith.addi %0, %arg1 : i32
    %c0_i32 = arith.constant 0 : i32
    %c0_i32_0 = arith.constant 0 : i32
    return %1, %c0_i32 : i32, i32
  }
  func.func @transform_1(%arg0: i32, %arg1: i32) -> (i32, i32) {
    %c0_i32 = arith.constant 0 : i32
    %c0_i32_0 = arith.constant 0 : i32
    %c0_i32_1 = arith.constant 0 : i32
    return %c0_i32, %c0_i32_0 : i32, i32
  }
  func.func @transform_2(%arg0: i32, %arg1: i32) -> (i32, i32) {
    %c1_i32 = arith.constant 1 : i32
    %0 = arith.muli %arg0, %c1_i32 : i32
    %1 = arith.addi %0, %arg1 : i32
    %c0_i32 = arith.constant 0 : i32
    %c0_i32_0 = arith.constant 0 : i32
    return %1, %c0_i32 : i32, i32
  }
  func.func @transform_3(%arg0: i32, %arg1: i32) -> (i32, i32, i32) {
    %c0_i32 = arith.constant 0 : i32
    %c0_i32_0 = arith.constant 0 : i32
    %c0_i32_1 = arith.constant 0 : i32
    return %arg0, %c0_i32, %c0_i32_0 : i32, i32, i32
  }
}

module attributes {stable_mosaic.version = 11 : i64} {
  func.func @bn_act_kernel(%arg0: i32, %arg1: memref<256x16xbf16, #tpu.memory_space<vmem>>, %arg2: memref<2x16xf32, #tpu.memory_space<vmem>>, %arg3: memref<256x8xf32, #tpu.memory_space<vmem>>) attributes {dimension_semantics = [#tpu.dimension_semantics<parallel>], iteration_bounds = array<i64: 2>, scalar_prefetch = 0 : i64, scratch_operands = 0 : i64, tpu.core_type = #tpu.core_type<tc>, window_params = [{transform_indices = @transform_0, window_bounds = array<i64: 256, 16>}, {pipeline_mode = #tpu.pipeline_mode<synchronous>, transform_indices = @transform_1, window_bounds = array<i64: 2, 16>}, {transform_indices = @transform_2, window_bounds = array<i64: 256, 8>}]} {
    %c0 = arith.constant 0 : index
    %c0_0 = arith.constant 0 : index
    %0 = vector.load %arg1[%c0, %c0_0] : memref<256x16xbf16, #tpu.memory_space<vmem>>, vector<256x16xbf16>
    %1 = arith.extf %0 : vector<256x16xbf16> to vector<256x16xf32>
    %c0_1 = arith.constant 0 : index
    %c0_2 = arith.constant 0 : index
    %2 = vector.load %arg2[%c0_1, %c0_2] : memref<2x16xf32, #tpu.memory_space<vmem>>, vector<1x16xf32>
    %3 = vector.broadcast %2 : vector<1x16xf32> to vector<256x16xf32>
    %4 = arith.mulf %1, %3 : vector<256x16xf32>
    %c1 = arith.constant 1 : index
    %c0_3 = arith.constant 0 : index
    %5 = vector.load %arg2[%c1, %c0_3] : memref<2x16xf32, #tpu.memory_space<vmem>>, vector<1x16xf32>
    %6 = vector.broadcast %5 : vector<1x16xf32> to vector<256x16xf32>
    %7 = arith.addf %4, %6 : vector<256x16xf32>
    %8 = vector.extract_strided_slice %7 {offsets = [0, 0], sizes = [256, 8], strides = [1, 1]} : vector<256x16xf32> to vector<256x8xf32>
    %9 = vector.extract_strided_slice %7 {offsets = [0, 8], sizes = [256, 8], strides = [1, 1]} : vector<256x16xf32> to vector<256x8xf32>
    %10 = arith.addf %8, %9 : vector<256x8xf32>
    %cst = arith.constant 0.000000e+00 : f32
    %11 = vector.broadcast %cst : f32 to vector<256x8xf32>
    %12 = arith.subf %11, %10 : vector<256x8xf32>
    %13 = math.exp %12 : vector<256x8xf32>
    %cst_4 = arith.constant 1.000000e+00 : f32
    %14 = vector.broadcast %cst_4 : f32 to vector<256x8xf32>
    %15 = arith.addf %14, %13 : vector<256x8xf32>
    %16 = tpu.reciprocal %15 {approx = true} : vector<256x8xf32> -> vector<256x8xf32>
    %17 = arith.mulf %10, %16 : vector<256x8xf32>
    %c0_5 = arith.constant 0 : index
    %c0_6 = arith.constant 0 : index
    %18 = vector.load %arg3[%c0_5, %c0_6] : memref<256x8xf32, #tpu.memory_space<vmem>>, vector<256x8xf32>
    tpu.vector_store %arg3[%c0_5, %c0_6], %17 {strides = array<i32>} : memref<256x8xf32, #tpu.memory_space<vmem>>, vector<256x8xf32>,
    return
  }
  func.func @transform_0(%arg0: i32) -> (i32, i32) {
    %c0_i32 = arith.constant 0 : i32
    %c0_i32_0 = arith.constant 0 : i32
    return %arg0, %c0_i32 : i32, i32
  }
  func.func @transform_1(%arg0: i32) -> (i32, i32) {
    %c0_i32 = arith.constant 0 : i32
    %c0_i32_0 = arith.constant 0 : i32
    %c0_i32_1 = arith.constant 0 : i32
    return %c0_i32, %c0_i32_0 : i32, i32
  }
  func.func @transform_2(%arg0: i32) -> (i32, i32) {
    %c0_i32 = arith.constant 0 : i32
    %c0_i32_0 = arith.constant 0 : i32
    return %arg0, %c0_i32 : i32, i32
  }
}

</mosaic_0001>

<llo_original>
// kernel: repconv_forward.3
$region0: #{repconv_forward.3}
  #allocation0 [shape = 'u32[]', space=smem, size = 0x4, offset = 0x4, fixed_abs, tag = 'smem constant byte address 0x4 - core index']
  #allocation1 [shape = 'u32[144,128]{1,0:T(1,128)}', space=vmem, size = 0x12000, scoped, tag = 'internal scratch']
  %s0 = inlined_call_operand.hbm [shape: bf16[512,16], index: 0, kind: input, shape index: {}]
  %s1 = inlined_call_operand.hbm [shape: f32[2,16], index: 1, kind: input, shape index: {}]
  %s2 = inlined_call_operand.hbm [shape: f32[512,8], index: 2, kind: output, shape index: {}]
  %s3 = sld [smem:[#allocation0]]
  $region49: #{repconv_forward.3} parent=0
    _
  %s5 = ssub.s32 1, %s3
  %s6 = scalar_select 0, %s5, %s3
  $region1: #{repconv_forward.3} parent=0
    #allocation2 [shape = 'u8[131072]{0}', space=vmem, size = 0x20000, scoped, tag = 'input window, operand 0']
    #allocation3 [shape = 's32[2]{0}', space=sflag, size = 0x8, scoped, tag = 'scoped memory for repconv_forward.3']
    #allocation4 [shape = 's32[2]{0}', space=sflag, size = 0x8, scoped, tag = 'scoped memory for repconv_forward.3']
    #allocation5 [shape = 'u8[1024]{0}', space=vmem, size = 0x400, scoped, tag = 'input window, operand 1, single buffered']
    #allocation6 [shape = 's32[1]{0}', space=sflag, size = 0x4, scoped, tag = 'scoped memory for repconv_forward.3']
    #allocation7 [shape = 'u8[262144]{0}', space=vmem, size = 0x40000, scoped, tag = 'output window, operand 0']
    %7 = vsyncpa [#allocation3], 0
    %s8 = scalar_lea.sflag [#allocation3], 1
    %9 = vsyncpa %s8, 0
    %10 = vsyncpa [#allocation6], 0
    %11 = vsyncpa [#allocation4], 0
    %s12 = scalar_lea.sflag [#allocation4], 1
    %13 = vsyncpa %s12, 0
    loop: start=0, step=1, limit=4
    $region2: #{repconv_forward.3} parent=1 // loop_pre_header
      _
    $region3: #{repconv_forward.3} parent=1 // loop_header
      %s15 = sphi 0, %s19
      %p16 = scmp.ge.s32.totalorder %s15, 4
      %s25 = sphi 0, %s27
      %s28 = sphi 0, %s25
      %s29 = sphi 0, %s28
      %s45 = sphi 0, %s29
      %s49 = sphi 0, %s49
      %s51 = sphi 0, %s49
      %s52 = sphi 0, %s51
      %s66 = sphi 0, %s52
      %s72 = sphi 0, %s74
      %s75 = sphi 0, %s72
      %s76 = sphi 0, %s75
      %s92 = sphi 0, %s76
    $region4: #{repconv_forward.3} parent=1 // loop_header_branch
      %18 = sbr.rel (%p16) target = $region8
    $region5: #{repconv_forward.3} parent=1 // loop_body
      %s20 = ssub.s32 %s15, 1
      %s21 = ssub.s32 %s15, 2
      %s22 = sadd.s32 %s15, 1
      %s23 = ssub.s32 %s15, %s22
      %p24 = scmp.eq.s32.totalorder %s23, 0
      %s26 = sadd.s32 %s25, 1
      %s27 = scalar_select %p24, %s25, %s26
      %p30 = pneg %p24
      %p31 = scmp.eq.s32.totalorder %s15, 1
      %p32 = por %p30, %p31
      %p33 = scmp.ne.s32.totalorder %s25, %s28
      %p34 = scmp.eq.s32.totalorder %s15, 0
      %p35 = por %p33, %p34
      %p36 = scmp.ne.s32.totalorder %s25, %s28
      %p37 = scmp.eq.s32.totalorder %s20, 1
      %p38 = por %p36, %p37
      %p39 = scmp.ne.s32.totalorder %s28, %s29
      %p40 = scmp.eq.s32.totalorder %s20, 0
      %p41 = por %p39, %p40
      %p42 = scmp.ne.s32.totalorder %s28, %s29
      %p43 = scmp.eq.s32.totalorder %s21, 1
      %p44 = por %p42, %p43
      %p46 = scmp.ne.s32.totalorder %s29, %s45
      %p47 = scmp.eq.s32.totalorder %s21, 0
      %p48 = por %p46, %p47
      %s50 = sadd.s32 %s49, 1
      %p53 = scmp.eq.s32.totalorder %s15, 1
      %p54 = scmp.ne.s32.totalorder %s49, %s51
      %p55 = scmp.eq.s32.totalorder %s15, 0
      %p56 = por %p54, %p55
      %p57 = scmp.ne.s32.totalorder %s49, %s51
      %p58 = scmp.eq.s32.totalorder %s20, 1
      %p59 = por %p57, %p58
      %p60 = scmp.ne.s32.totalorder %s51, %s52
      %p61 = scmp.eq.s32.totalorder %s20, 0
      %p62 = por %p60, %p61
      %p63 = scmp.ne.s32.totalorder %s51, %s52
      %p64 = scmp.eq.s32.totalorder %s21, 1
      %p65 = por %p63, %p64
      %p67 = scmp.ne.s32.totalorder %s52, %s66
      %p68 = scmp.eq.s32.totalorder %s21, 0
      %p69 = por %p67, %p68
      %s70 = ssub.s32 %s15, %s22
      %p71 = scmp.eq.s32.totalorder %s70, 0
      %s73 = sadd.s32 %s72, 1
      %s74 = scalar_select %p71, %s72, %s73
      %p77 = pneg %p71
      %p78 = scmp.eq.s32.totalorder %s15, 1
      %p79 = por %p77, %p78
      %p80 = scmp.ne.s32.totalorder %s72, %s75
      %p81 = scmp.eq.s32.totalorder %s15, 0
      %p82 = por %p80, %p81
      %p83 = scmp.ne.s32.totalorder %s72, %s75
      %p84 = scmp.eq.s32.totalorder %s20, 1
      %p85 = por %p83, %p84
      %p86 = scmp.ne.s32.totalorder %s75, %s76
      %p87 = scmp.eq.s32.totalorder %s20, 0
      %p88 = por %p86, %p87
      %p89 = scmp.ne.s32.totalorder %s75, %s76
      %p90 = scmp.eq.s32.totalorder %s21, 1
      %p91 = por %p89, %p90
      %p93 = scmp.ne.s32.totalorder %s76, %s92
      %p94 = scmp.eq.s32.totalorder %s21, 0
      %p95 = por %p93, %p94
      %p96 = scmp.le.s32.totalorder 1, %s15
      %p97 = scmp.lt.s32.totalorder %s15, 3
      %p98 = pnand %p96, %p97
      %p99 = pneg %p98
      // Predicated region
      $region9: #{repconv_forward.3} parent=5 // pred_check
        _
      $region10: #{repconv_forward.3} parent=5 // pred_check_branch
        %101 = sbr.rel (%p98) target = $region12
      $region11: #{repconv_forward.3} parent=5 // pred_region
        %s102 = ssub.s32 %s15, 1
        // Predicated region
        $region13: #{repconv_forward.3} parent=11 // pred_check
          %p103 = pneg %p62
        $region14: #{repconv_forward.3} parent=11 // pred_check_branch
          %105 = sbr.rel (%p103) target = $region16
        $region15: #{repconv_forward.3} parent=11 // pred_region
          %s107 = ssub.s32 32, 32
          %108 = vsyncadd [#allocation6], %s107
          %s110 = sshll.u32 [#allocation5], 4
          %s111 = int_to_ptr.vmem [resolvable:$true] %s110
          %113 = dma.hbm_to_vmem [thread:$0]  %s1, 32, %s111, [#allocation6]
        $region16: #{repconv_forward.3} parent=11 // pred_fallthru
          _
      $region12: #{repconv_forward.3} parent=5 // pred_fallthru
        _
      %p114 = scmp.lt.s32.totalorder %s15, 2
      // Predicated region
      $region17: #{repconv_forward.3} parent=5 // pred_check
        %p115 = pneg %p114
      $region18: #{repconv_forward.3} parent=5 // pred_check_branch
        %117 = sbr.rel (%p115) target = $region20
      $region19: #{repconv_forward.3} parent=5 // pred_region
        // Predicated region
        $region21: #{repconv_forward.3} parent=19 // pred_check
          %p118 = pneg %p35
        $region22: #{repconv_forward.3} parent=19 // pred_check_branch
          %120 = sbr.rel (%p118) target = $region24
        $region23: #{repconv_forward.3} parent=19 // pred_region
          %s121 = sand.u32 %s25, 1
          %s122 = scalar_lea.sflag [#allocation3], %s121
          %s123 = sand.u32 %s25, 1
          %s124 = smul.addr %s123, 128
          %s125 = scalar_lea.vmem [#allocation2], %s124
          %s126 = smul.u32 32, %s15
          %s128 = ssub.s32 2048, 2048
          %129 = vsyncadd %s122, %s128
          %s130 = smul.addr %s126, 64
          %s131 = scalar_lea.hbm %s0, %s130
          %s132 = sshll.u32 %s125, 4
          %s133 = int_to_ptr.vmem [resolvable:$true] %s132
          %138 = dma.hbm_to_vmem [thread:$0]  %s131, 2048, %s133, %s122, 64, 64, 4
        $region24: #{repconv_forward.3} parent=19 // pred_fallthru
          _
      $region20: #{repconv_forward.3} parent=5 // pred_fallthru
        _
      %p139 = scmp.le.s32.totalorder 1, %s15
      %p140 = scmp.lt.s32.totalorder %s15, 3
      %p141 = pnand %p139, %p140
      %p142 = pneg %p141
      // Predicated region
      $region25: #{repconv_forward.3} parent=5 // pred_check
        _
      $region26: #{repconv_forward.3} parent=5 // pred_check_branch
        %144 = sbr.rel (%p141) target = $region28
      $region27: #{repconv_forward.3} parent=5 // pred_region
        %s145 = ssub.s32 %s15, 1
        %s146 = sand.u32 %s28, 1
        %s147 = scalar_lea.sflag [#allocation3], %s146
        %s148 = sand.u32 %s28, 1
        %s149 = smul.addr %s148, 128
        %s150 = scalar_lea.vmem [#allocation2], %s149
        // Predicated region
        $region29: #{repconv_forward.3} parent=27 // pred_check
          %p151 = pneg %p41
        $region30: #{repconv_forward.3} parent=27 // pred_check_branch
          %153 = sbr.rel (%p151) target = $region32
        $region31: #{repconv_forward.3} parent=27 // pred_region
          %154 = dma.done %s147, 2048
        $region32: #{repconv_forward.3} parent=27 // pred_fallthru
          _
        // Predicated region
        $region33: #{repconv_forward.3} parent=27 // pred_check
          %p155 = pneg %p62
        $region34: #{repconv_forward.3} parent=27 // pred_check_branch
          %157 = sbr.rel (%p155) target = $region36
        $region35: #{repconv_forward.3} parent=27 // pred_region
          %158 = dma.done [#allocation6], 32
        $region36: #{repconv_forward.3} parent=27 // pred_fallthru
          _
        %s159 = sand.u32 %s28, 1
        %s160 = scalar_lea.sflag [#allocation3], %s159
        %s161 = sand.u32 %s28, 1
        %s162 = smul.addr %s161, 128
        %s163 = scalar_lea.vmem [#allocation2], %s162
        %p164 = pneg %p41
        %p165 = pneg %p38
        %p166 = pneg %p62
        %p167 = pneg %p59
        %p168 = pneg %p88
        %p169 = pneg %p85
        %s170 = sand.u32 %s75, 1
        %s171 = scalar_lea.sflag [#allocation4], %s170
        %s172 = sand.u32 %s75, 1
        %s173 = smul.addr %s172, 256
        %s174 = scalar_lea.vmem [#allocation7], %s173
        %s175 = smul.u32 32, %s20
        %s176 = smul.u32 32, %s20
        %v177 = vld [vmem:[%s150] sm:$0xf]
        %v178 = vld [vmem:[%s150 + $0x4] sm:$0xf]
        %v179 = vld [vmem:[%s150 + $0x8] sm:$0xf]
        %v180 = vld [vmem:[%s150 + $0xc] sm:$0xf]
        %v181 = vld [vmem:[%s150 + $0x10] sm:$0xf]
        %v182 = vld [vmem:[%s150 + $0x14] sm:$0xf]
        %v183 = vld [vmem:[%s150 + $0x18] sm:$0xf]
        %v184 = vld [vmem:[%s150 + $0x1c] sm:$0xf]
        %v185 = vld [vmem:[%s150 + $0x20] sm:$0xf]
        %v186 = vld [vmem:[%s150 + $0x24] sm:$0xf]
        %v187 = vld [vmem:[%s150 + $0x28] sm:$0xf]
        %v188 = vld [vmem:[%s150 + $0x2c] sm:$0xf]
        %v189 = vld [vmem:[%s150 + $0x30] sm:$0xf]
        %v190 = vld [vmem:[%s150 + $0x34] sm:$0xf]
        %v191 = vld [vmem:[%s150 + $0x38] sm:$0xf]
        %v192 = vld [vmem:[%s150 + $0x3c] sm:$0xf]
        %v193 = vld [vmem:[%s150 + $0x40] sm:$0xf]
        %v194 = vld [vmem:[%s150 + $0x44] sm:$0xf]
        %v195 = vld [vmem:[%s150 + $0x48] sm:$0xf]
        %v196 = vld [vmem:[%s150 + $0x4c] sm:$0xf]
        %v197 = vld [vmem:[%s150 + $0x50] sm:$0xf]
        %v198 = vld [vmem:[%s150 + $0x54] sm:$0xf]
        %v199 = vld [vmem:[%s150 + $0x58] sm:$0xf]
        %v200 = vld [vmem:[%s150 + $0x5c] sm:$0xf]
        %v201 = vld [vmem:[%s150 + $0x60] sm:$0xf]
        %v202 = vld [vmem:[%s150 + $0x64] sm:$0xf]
        %v203 = vld [vmem:[%s150 + $0x68] sm:$0xf]
        %v204 = vld [vmem:[%s150 + $0x6c] sm:$0xf]
        %v205 = vld [vmem:[%s150 + $0x70] sm:$0xf]
        %v206 = vld [vmem:[%s150 + $0x74] sm:$0xf]
        %v207 = vld [vmem:[%s150 + $0x78] sm:$0xf]
        %v208 = vld [vmem:[%s150 + $0x7c] sm:$0xf]
        %v209 = vunpack.c.l.bf16 %v177
        %v210 = vunpack.c.l.bf16 %v178
        %v211 = vunpack.c.l.bf16 %v179
        %v212 = vunpack.c.l.bf16 %v180
        %v213 = vunpack.c.l.bf16 %v181
        %v214 = vunpack.c.l.bf16 %v182
        %v215 = vunpack.c.l.bf16 %v183
        %v216 = vunpack.c.l.bf16 %v184
        %v217 = vunpack.c.l.bf16 %v185
        %v218 = vunpack.c.l.bf16 %v186
        %v219 = vunpack.c.l.bf16 %v187
        %v220 = vunpack.c.l.bf16 %v188
        %v221 = vunpack.c.l.bf16 %v189
        %v222 = vunpack.c.l.bf16 %v190
        %v223 = vunpack.c.l.bf16 %v191
        %v224 = vunpack.c.l.bf16 %v192
        %v225 = vunpack.c.l.bf16 %v193
        %v226 = vunpack.c.l.bf16 %v194
        %v227 = vunpack.c.l.bf16 %v195
        %v228 = vunpack.c.l.bf16 %v196
        %v229 = vunpack.c.l.bf16 %v197
        %v230 = vunpack.c.l.bf16 %v198
        %v231 = vunpack.c.l.bf16 %v199
        %v232 = vunpack.c.l.bf16 %v200
        %v233 = vunpack.c.l.bf16 %v201
        %v234 = vunpack.c.l.bf16 %v202
        %v235 = vunpack.c.l.bf16 %v203
        %v236 = vunpack.c.l.bf16 %v204
        %v237 = vunpack.c.l.bf16 %v205
        %v238 = vunpack.c.l.bf16 %v206
        %v239 = vunpack.c.l.bf16 %v207
        %v240 = vunpack.c.l.bf16 %v208
        %v241 = vld [vmem:[#allocation5] sm:$0x1]
        %v242 = vlaneseq
        %v243 = vshrl.u32 %v242, 7
        %v244 = vsub.s32 0, %v243
        %v245 = vrot.slane %v241, %v244
        %v246 = vmul.f32 %v209, %v245
        %v247 = vmul.f32 %v210, %v245
        %v248 = vmul.f32 %v211, %v245
        %v249 = vmul.f32 %v212, %v245
        %v250 = vmul.f32 %v213, %v245
        %v251 = vmul.f32 %v214, %v245
        %v252 = vmul.f32 %v215, %v245
        %v253 = vmul.f32 %v216, %v245
        %v254 = vmul.f32 %v217, %v245
        %v255 = vmul.f32 %v218, %v245
        %v256 = vmul.f32 %v219, %v245
        %v257 = vmul.f32 %v220, %v245
        %v258 = vmul.f32 %v221, %v245
        %v259 = vmul.f32 %v222, %v245
        %v260 = vmul.f32 %v223, %v245
        %v261 = vmul.f32 %v224, %v245
        %v262 = vmul.f32 %v225, %v245
        %v263 = vmul.f32 %v226, %v245
        %v264 = vmul.f32 %v227, %v245
        %v265 = vmul.f32 %v228, %v245
        %v266 = vmul.f32 %v229, %v245
        %v267 = vmul.f32 %v230, %v245
        %v268 = vmul.f32 %v231, %v245
        %v269 = vmul.f32 %v232, %v245
        %v270 = vmul.f32 %v233, %v245
        %v271 = vmul.f32 %v234, %v245
        %v272 = vmul.f32 %v235, %v245
        %v273 = vmul.f32 %v236, %v245
        %v274 = vmul.f32 %v237, %v245
        %v275 = vmul.f32 %v238, %v245
        %v276 = vmul.f32 %v239, %v245
        %v277 = vmul.f32 %v240, %v245
        %v278 = vld [vmem:[#allocation5 + $0x1] sm:$0x1]
        %v279 = vlaneseq
        %v280 = vshrl.u32 %v279, 7
        %v281 = vsub.s32 0, %v280
        %v282 = vrot.slane %v278, %v281
        %v283 = vadd.f32 %v246, %v282
        %v284 = vadd.f32 %v247, %v282
        %v285 = vadd.f32 %v248, %v282
        %v286 = vadd.f32 %v249, %v282
        %v287 = vadd.f32 %v250, %v282
        %v288 = vadd.f32 %v251, %v282
        %v289 = vadd.f32 %v252, %v282
        %v290 = vadd.f32 %v253, %v282
        %v291 = vadd.f32 %v254, %v282
        %v292 = vadd.f32 %v255, %v282
        %v293 = vadd.f32 %v256, %v282
        %v294 = vadd.f32 %v257, %v282
        %v295 = vadd.f32 %v258, %v282
        %v296 = vadd.f32 %v259, %v282
        %v297 = vadd.f32 %v260, %v282
        %v298 = vadd.f32 %v261, %v282
        %v299 = vadd.f32 %v262, %v282
        %v300 = vadd.f32 %v263, %v282
        %v301 = vadd.f32 %v264, %v282
        %v302 = vadd.f32 %v265, %v282
        %v303 = vadd.f32 %v266, %v282
        %v304 = vadd.f32 %v267, %v282
        %v305 = vadd.f32 %v268, %v282
        %v306 = vadd.f32 %v269, %v282
        %v307 = vadd.f32 %v270, %v282
        %v308 = vadd.f32 %v271, %v282
        %v309 = vadd.f32 %v272, %v282
        %v310 = vadd.f32 %v273, %v282
        %v311 = vadd.f32 %v274, %v282
        %v312 = vadd.f32 %v275, %v282
        %v313 = vadd.f32 %v276, %v282
        %v314 = vadd.f32 %v277, %v282
        %347 = vrot.lane.b32.xlu0 %v283, 120
        %v348 = vpop.permute.xlu0 %347
        %349 = vrot.lane.b32.xlu0 %v284, 120
        %v350 = vpop.permute.xlu0 %349
        %351 = vrot.lane.b32.xlu0 %v285, 120
        %v352 = vpop.permute.xlu0 %351
        %353 = vrot.lane.b32.xlu0 %v286, 120
        %v354 = vpop.permute.xlu0 %353
        %355 = vrot.lane.b32.xlu0 %v287, 120
        %v356 = vpop.permute.xlu0 %355
        %357 = vrot.lane.b32.xlu0 %v288, 120
        %v358 = vpop.permute.xlu0 %357
        %359 = vrot.lane.b32.xlu0 %v289, 120
        %v360 = vpop.permute.xlu0 %359
        %361 = vrot.lane.b32.xlu0 %v290, 120
        %v362 = vpop.permute.xlu0 %361
        %363 = vrot.lane.b32.xlu0 %v291, 120
        %v364 = vpop.permute.xlu0 %363
        %365 = vrot.lane.b32.xlu0 %v292, 120
        %v366 = vpop.permute.xlu0 %365
        %367 = vrot.lane.b32.xlu0 %v293, 120
        %v368 = vpop.permute.xlu0 %367
        %369 = vrot.lane.b32.xlu0 %v294, 120
        %v370 = vpop.permute.xlu0 %369
        %371 = vrot.lane.b32.xlu0 %v295, 120
        %v372 = vpop.permute.xlu0 %371
        %373 = vrot.lane.b32.xlu0 %v296, 120
        %v374 = vpop.permute.xlu0 %373
        %375 = vrot.lane.b32.xlu0 %v297, 120
        %v376 = vpop.permute.xlu0 %375
        %377 = vrot.lane.b32.xlu0 %v298, 120
        %v378 = vpop.permute.xlu0 %377
        %379 = vrot.lane.b32.xlu0 %v299, 120
        %v380 = vpop.permute.xlu0 %379
        %381 = vrot.lane.b32.xlu0 %v300, 120
        %v382 = vpop.permute.xlu0 %381
        %383 = vrot.lane.b32.xlu0 %v301, 120
        %v384 = vpop.permute.xlu0 %383
        %385 = vrot.lane.b32.xlu0 %v302, 120
        %v386 = vpop.permute.xlu0 %385
        %387 = vrot.lane.b32.xlu0 %v303, 120
        %v388 = vpop.permute.xlu0 %387
        %389 = vrot.lane.b32.xlu0 %v304, 120
        %v390 = vpop.permute.xlu0 %389
        %391 = vrot.lane.b32.xlu0 %v305, 120
        %v392 = vpop.permute.xlu0 %391
        %393 = vrot.lane.b32.xlu0 %v306, 120
        %v394 = vpop.permute.xlu0 %393
        %395 = vrot.lane.b32.xlu0 %v307, 120
        %v396 = vpop.permute.xlu0 %395
        %397 = vrot.lane.b32.xlu0 %v308, 120
        %v398 = vpop.permute.xlu0 %397
        %399 = vrot.lane.b32.xlu0 %v309, 120
        %v400 = vpop.permute.xlu0 %399
        %401 = vrot.lane.b32.xlu0 %v310, 120
        %v402 = vpop.permute.xlu0 %401
        %403 = vrot.lane.b32.xlu0 %v311, 120
        %v404 = vpop.permute.xlu0 %403
        %405 = vrot.lane.b32.xlu0 %v312, 120
        %v406 = vpop.permute.xlu0 %405
        %407 = vrot.lane.b32.xlu0 %v313, 120
        %v408 = vpop.permute.xlu0 %407
        %409 = vrot.lane.b32.xlu0 %v314, 120
        %v410 = vpop.permute.xlu0 %409
        %v443 = vadd.f32 %v283, %v348
        %v444 = vadd.f32 %v284, %v350
        %v445 = vadd.f32 %v285, %v352
        %v446 = vadd.f32 %v286, %v354
        %v447 = vadd.f32 %v287, %v356
        %v448 = vadd.f32 %v288, %v358
        %v449 = vadd.f32 %v289, %v360
        %v450 = vadd.f32 %v290, %v362
        %v451 = vadd.f32 %v291, %v364
        %v452 = vadd.f32 %v292, %v366
        %v453 = vadd.f32 %v293, %v368
        %v454 = vadd.f32 %v294, %v370
        %v455 = vadd.f32 %v295, %v372
        %v456 = vadd.f32 %v296, %v374
        %v457 = vadd.f32 %v297, %v376
        %v458 = vadd.f32 %v298, %v378
        %v459 = vadd.f32 %v299, %v380
        %v460 = vadd.f32 %v300, %v382
        %v461 = vadd.f32 %v301, %v384
        %v462 = vadd.f32 %v302, %v386
        %v463 = vadd.f32 %v303, %v388
        %v464 = vadd.f32 %v304, %v390
        %v465 = vadd.f32 %v305, %v392
        %v466 = vadd.f32 %v306, %v394
        %v467 = vadd.f32 %v307, %v396
        %v468 = vadd.f32 %v308, %v398
        %v469 = vadd.f32 %v309, %v400
        %v470 = vadd.f32 %v310, %v402
        %v471 = vadd.f32 %v311, %v404
        %v472 = vadd.f32 %v312, %v406
        %v473 = vadd.f32 %v313, %v408
        %v474 = vadd.f32 %v314, %v410
        %v475 = vsub.f32 0.0, %v443
        %v476 = vsub.f32 0.0, %v444
        %v477 = vsub.f32 0.0, %v445
        %v478 = vsub.f32 0.0, %v446
        %v479 = vsub.f32 0.0, %v447
        %v480 = vsub.f32 0.0, %v448
        %v481 = vsub.f32 0.0, %v449
        %v482 = vsub.f32 0.0, %v450
        %v483 = vsub.f32 0.0, %v451
        %v484 = vsub.f32 0.0, %v452
        %v485 = vsub.f32 0.0, %v453
        %v486 = vsub.f32 0.0, %v454
        %v487 = vsub.f32 0.0, %v455
        %v488 = vsub.f32 0.0, %v456
        %v489 = vsub.f32 0.0, %v457
        %v490 = vsub.f32 0.0, %v458
        %v491 = vsub.f32 0.0, %v459
        %v492 = vsub.f32 0.0, %v460
        %v493 = vsub.f32 0.0, %v461
        %v494 = vsub.f32 0.0, %v462
        %v495 = vsub.f32 0.0, %v463
        %v496 = vsub.f32 0.0, %v464
        %v497 = vsub.f32 0.0, %v465
        %v498 = vsub.f32 0.0, %v466
        %v499 = vsub.f32 0.0, %v467
        %v500 = vsub.f32 0.0, %v468
        %v501 = vsub.f32 0.0, %v469
        %v502 = vsub.f32 0.0, %v470
        %v503 = vsub.f32 0.0, %v471
        %v504 = vsub.f32 0.0, %v472
        %v505 = vsub.f32 0.0, %v473
        %v506 = vsub.f32 0.0, %v474
        %v507 = vmul.f32 %v475, 1.442695
        %v508 = vpow.pop %v507
        %v509 = vmul.f32 %v476, 1.442695
        %v510 = vpow.pop %v509
        %v511 = vmul.f32 %v477, 1.442695
        %v512 = vpow.pop %v511
        %v513 = vmul.f32 %v478, 1.442695
        %v514 = vpow.pop %v513
        %v515 = vmul.f32 %v479, 1.442695
        %v516 = vpow.pop %v515
        %v517 = vmul.f32 %v480, 1.442695
        %v518 = vpow.pop %v517
        %v519 = vmul.f32 %v481, 1.442695
        %v520 = vpow.pop %v519
        %v521 = vmul.f32 %v482, 1.442695
        %v522 = vpow.pop %v521
        %v523 = vmul.f32 %v483, 1.442695
        %v524 = vpow.pop %v523
        %v525 = vmul.f32 %v484, 1.442695
        %v526 = vpow.pop %v525
        %v527 = vmul.f32 %v485, 1.442695
        %v528 = vpow.pop %v527
        %v529 = vmul.f32 %v486, 1.442695
        %v530 = vpow.pop %v529
        %v531 = vmul.f32 %v487, 1.442695
        %v532 = vpow.pop %v531
        %v533 = vmul.f32 %v488, 1.442695
        %v534 = vpow.pop %v533
        %v535 = vmul.f32 %v489, 1.442695
        %v536 = vpow.pop %v535
        %v537 = vmul.f32 %v490, 1.442695
        %v538 = vpow.pop %v537
        %v539 = vmul.f32 %v491, 1.442695
        %v540 = vpow.pop %v539
        %v541 = vmul.f32 %v492, 1.442695
        %v542 = vpow.pop %v541
        %v543 = vmul.f32 %v493, 1.442695
        %v544 = vpow.pop %v543
        %v545 = vmul.f32 %v494, 1.442695
        %v546 = vpow.pop %v545
        %v547 = vmul.f32 %v495, 1.442695
        %v548 = vpow.pop %v547
        %v549 = vmul.f32 %v496, 1.442695
        %v550 = vpow.pop %v549
        %v551 = vmul.f32 %v497, 1.442695
        %v552 = vpow.pop %v551
        %v553 = vmul.f32 %v498, 1.442695
        %v554 = vpow.pop %v553
        %v555 = vmul.f32 %v499, 1.442695
        %v556 = vpow.pop %v555
        %v557 = vmul.f32 %v500, 1.442695
        %v558 = vpow.pop %v557
        %v559 = vmul.f32 %v501, 1.442695
        %v560 = vpow.pop %v559
        %v561 = vmul.f32 %v502, 1.442695
        %v562 = vpow.pop %v561
        %v563 = vmul.f32 %v503, 1.442695
        %v564 = vpow.pop %v563
        %v565 = vmul.f32 %v504, 1.442695
        %v566 = vpow.pop %v565
        %v567 = vmul.f32 %v505, 1.442695
        %v568 = vpow.pop %v567
        %v569 = vmul.f32 %v506, 1.442695
        %v570 = vpow.pop %v569
        %v571 = vadd.f32 %v508, 1.0
        %v572 = vadd.f32 %v510, 1.0
        %v573 = vadd.f32 %v512, 1.0
        %v574 = vadd.f32 %v514, 1.0
        %v575 = vadd.f32 %v516, 1.0
        %v576 = vadd.f32 %v518, 1.0
        %v577 = vadd.f32 %v520, 1.0
        %v578 = vadd.f32 %v522, 1.0
        %v579 = vadd.f32 %v524, 1.0
        %v580 = vadd.f32 %v526, 1.0
        %v581 = vadd.f32 %v528, 1.0
        %v582 = vadd.f32 %v530, 1.0
        %v583 = vadd.f32 %v532, 1.0
        %v584 = vadd.f32 %v534, 1.0
        %v585 = vadd.f32 %v536, 1.0
        %v586 = vadd.f32 %v538, 1.0
        %v587 = vadd.f32 %v540, 1.0
        %v588 = vadd.f32 %v542, 1.0
        %v589 = vadd.f32 %v544, 1.0
        %v590 = vadd.f32 %v546, 1.0
        %v591 = vadd.f32 %v548, 1.0
        %v592 = vadd.f32 %v550, 1.0
        %v593 = vadd.f32 %v552, 1.0
        %v594 = vadd.f32 %v554, 1.0
        %v595 = vadd.f32 %v556, 1.0
        %v596 = vadd.f32 %v558, 1.0
        %v597 = vadd.f32 %v560, 1.0
        %v598 = vadd.f32 %v562, 1.0
        %v599 = vadd.f32 %v564, 1.0
        %v600 = vadd.f32 %v566, 1.0
        %v601 = vadd.f32 %v568, 1.0
        %v602 = vadd.f32 %v570, 1.0
        %v603 = vrcp.pop %v571
        %v604 = vrcp.pop %v572
        %v605 = vrcp.pop %v573
        %v606 = vrcp.pop %v574
        %v607 = vrcp.pop %v575
        %v608 = vrcp.pop %v576
        %v609 = vrcp.pop %v577
        %v610 = vrcp.pop %v578
        %v611 = vrcp.pop %v579
        %v612 = vrcp.pop %v580
        %v613 = vrcp.pop %v581
        %v614 = vrcp.pop %v582
        %v615 = vrcp.pop %v583
        %v616 = vrcp.pop %v584
        %v617 = vrcp.pop %v585
        %v618 = vrcp.pop %v586
        %v619 = vrcp.pop %v587
        %v620 = vrcp.pop %v588
        %v621 = vrcp.pop %v589
        %v622 = vrcp.pop %v590
        %v623 = vrcp.pop %v591
        %v624 = vrcp.pop %v592
        %v625 = vrcp.pop %v593
        %v626 = vrcp.pop %v594
        %v627 = vrcp.pop %v595
        %v628 = vrcp.pop %v596
        %v629 = vrcp.pop %v597
        %v630 = vrcp.pop %v598
        %v631 = vrcp.pop %v599
        %v632 = vrcp.pop %v600
        %v633 = vrcp.pop %v601
        %v634 = vrcp.pop %v602
        %v635 = vmul.f32 %v443, %v603
        %v636 = vmul.f32 %v444, %v604
        %v637 = vmul.f32 %v445, %v605
        %v638 = vmul.f32 %v446, %v606
        %v639 = vmul.f32 %v447, %v607
        %v640 = vmul.f32 %v448, %v608
        %v641 = vmul.f32 %v449, %v609
        %v642 = vmul.f32 %v450, %v610
        %v643 = vmul.f32 %v451, %v611
        %v644 = vmul.f32 %v452, %v612
        %v645 = vmul.f32 %v453, %v613
        %v646 = vmul.f32 %v454, %v614
        %v647 = vmul.f32 %v455, %v615
        %v648 = vmul.f32 %v456, %v616
        %v649 = vmul.f32 %v457, %v617
        %v650 = vmul.f32 %v458, %v618
        %v651 = vmul.f32 %v459, %v619
        %v652 = vmul.f32 %v460, %v620
        %v653 = vmul.f32 %v461, %v621
        %v654 = vmul.f32 %v462, %v622
        %v655 = vmul.f32 %v463, %v623
        %v656 = vmul.f32 %v464, %v624
        %v657 = vmul.f32 %v465, %v625
        %v658 = vmul.f32 %v466, %v626
        %v659 = vmul.f32 %v467, %v627
        %v660 = vmul.f32 %v468, %v628
        %v661 = vmul.f32 %v469, %v629
        %v662 = vmul.f32 %v470, %v630
        %v663 = vmul.f32 %v471, %v631
        %v664 = vmul.f32 %v472, %v632
        %v665 = vmul.f32 %v473, %v633
        %v666 = vmul.f32 %v474, %v634
        %vm667 = vcmask 64512
        %668 = vst.msk [vmem:[%s174] sm:$0xff] %vm667, %v635
        %669 = vst.msk [vmem:[%s174 + $0x8] sm:$0xff] %vm667, %v636
        %670 = vst.msk [vmem:[%s174 + $0x10] sm:$0xff] %vm667, %v637
        %671 = vst.msk [vmem:[%s174 + $0x18] sm:$0xff] %vm667, %v638
        %672 = vst.msk [vmem:[%s174 + $0x20] sm:$0xff] %vm667, %v639
        %673 = vst.msk [vmem:[%s174 + $0x28] sm:$0xff] %vm667, %v640
        %674 = vst.msk [vmem:[%s174 + $0x30] sm:$0xff] %vm667, %v641
        %675 = vst.msk [vmem:[%s174 + $0x38] sm:$0xff] %vm667, %v642
        %676 = vst.msk [vmem:[%s174 + $0x40] sm:$0xff] %vm667, %v643
        %677 = vst.msk [vmem:[%s174 + $0x48] sm:$0xff] %vm667, %v644
        %678 = vst.msk [vmem:[%s174 + $0x50] sm:$0xff] %vm667, %v645
        %679 = vst.msk [vmem:[%s174 + $0x58] sm:$0xff] %vm667, %v646
        %680 = vst.msk [vmem:[%s174 + $0x60] sm:$0xff] %vm667, %v647
        %681 = vst.msk [vmem:[%s174 + $0x68] sm:$0xff] %vm667, %v648
        %682 = vst.msk [vmem:[%s174 + $0x70] sm:$0xff] %vm667, %v649
        %683 = vst.msk [vmem:[%s174 + $0x78] sm:$0xff] %vm667, %v650
        %684 = vst.msk [vmem:[%s174 + $0x80] sm:$0xff] %vm667, %v651
        %685 = vst.msk [vmem:[%s174 + $0x88] sm:$0xff] %vm667, %v652
        %686 = vst.msk [vmem:[%s174 + $0x90] sm:$0xff] %vm667, %v653
        %687 = vst.msk [vmem:[%s174 + $0x98] sm:$0xff] %vm667, %v654
        %688 = vst.msk [vmem:[%s174 + $0xa0] sm:$0xff] %vm667, %v655
        %689 = vst.msk [vmem:[%s174 + $0xa8] sm:$0xff] %vm667, %v656
        %690 = vst.msk [vmem:[%s174 + $0xb0] sm:$0xff] %vm667, %v657
        %691 = vst.msk [vmem:[%s174 + $0xb8] sm:$0xff] %vm667, %v658
        %692 = vst.msk [vmem:[%s174 + $0xc0] sm:$0xff] %vm667, %v659
        %693 = vst.msk [vmem:[%s174 + $0xc8] sm:$0xff] %vm667, %v660
        %694 = vst.msk [vmem:[%s174 + $0xd0] sm:$0xff] %vm667, %v661
        %695 = vst.msk [vmem:[%s174 + $0xd8] sm:$0xff] %vm667, %v662
        %696 = vst.msk [vmem:[%s174 + $0xe0] sm:$0xff] %vm667, %v663
        %697 = vst.msk [vmem:[%s174 + $0xe8] sm:$0xff] %vm667, %v664
        %698 = vst.msk [vmem:[%s174 + $0xf0] sm:$0xff] %vm667, %v665
        %699 = vst.msk [vmem:[%s174 + $0xf8] sm:$0xff] %vm667, %v666
        %s700 = sand.u32 %s75, 1
        %s701 = scalar_lea.sflag [#allocation4], %s700
        %s702 = sand.u32 %s75, 1
        %s703 = smul.addr %s702, 256
        %s704 = scalar_lea.vmem [#allocation7], %s703
        // Predicated region
        $region37: #{repconv_forward.3} parent=27 // pred_check
          %p705 = pneg %p85
        $region38: #{repconv_forward.3} parent=27 // pred_check_branch
          %707 = sbr.rel (%p705) target = $region40
        $region39: #{repconv_forward.3} parent=27 // pred_region
          %s708 = smul.u32 32, %s20
          %s710 = ssub.s32 4096, 4096
          %711 = vsyncadd %s701, %s710
          %s712 = smul.addr %s708, 128
          %s713 = scalar_lea.hbm %s2, %s712
          %s714 = sshll.u32 %s704, 4
          %s715 = int_to_ptr.vmem [resolvable:$true] %s714
          %720 = dma.vmem_to_hbm [thread:$0]  %s715, 4096, %s713, %s701, 128, 128, 8
        $region40: #{repconv_forward.3} parent=27 // pred_fallthru
          _
      $region28: #{repconv_forward.3} parent=5 // pred_fallthru
        _
      %p721 = scmp.le.s32.totalorder 2, %s15
      // Predicated region
      $region41: #{repconv_forward.3} parent=5 // pred_check
        %p722 = pneg %p721
      $region42: #{repconv_forward.3} parent=5 // pred_check_branch
        %724 = sbr.rel (%p722) target = $region44
      $region43: #{repconv_forward.3} parent=5 // pred_region
        %s725 = ssub.s32 %s15, 2
        // Predicated region
        $region45: #{repconv_forward.3} parent=43 // pred_check
          %p726 = pneg %p91
        $region46: #{repconv_forward.3} parent=43 // pred_check_branch
          %728 = sbr.rel (%p726) target = $region48
        $region47: #{repconv_forward.3} parent=43 // pred_region
          %s729 = sand.u32 %s76, 1
          %s730 = scalar_lea.sflag [#allocation4], %s729
          %s731 = sand.u32 %s76, 1
          %s732 = smul.addr %s731, 256
          %s733 = scalar_lea.vmem [#allocation7], %s732
          %734 = dma.done %s730, 4096
        $region48: #{repconv_forward.3} parent=43 // pred_fallthru
          _
      $region44: #{repconv_forward.3} parent=5 // pred_fallthru
        _
    $region6: #{repconv_forward.3} parent=1 // loop_footer
      %s19 = sadd.s32 1, %s15
    $region7: #{repconv_forward.3} parent=1 // loop_footer_branch
      %14 = sbr.rel target = $region3
    $region8: #{repconv_forward.3} parent=1 // loop_exit
      _
    %735 = vsyncpa [#allocation3], 1
    %s736 = scalar_lea.sflag [#allocation3], 1
    %737 = vsyncpa %s736, 1
    %738 = vsyncpa [#allocation6], 1
    %739 = vsyncpa [#allocation4], 1
    %s740 = scalar_lea.sflag [#allocation4], 1
    %741 = vsyncpa %s740, 1

// kernel: repconv_forward.2
$region0: #{repconv_forward.2}
  #allocation0 [shape = 'u32[]', space=smem, size = 0x4, offset = 0x4, fixed_abs, tag = 'smem constant byte address 0x4 - core index']
  #allocation1 [shape = 'u32[144,128]{1,0:T(1,128)}', space=vmem, size = 0x12000, scoped, tag = 'internal scratch']
  %s0 = inlined_call_operand.hbm [shape: bf16[512,36], index: 0, kind: input, shape index: {}]
  %s1 = inlined_call_operand.hbm [shape: bf16[36,16], index: 1, kind: input, shape index: {}]
  %s2 = inlined_call_operand.hbm [shape: bf16[512,16], index: 2, kind: output, shape index: {0}]
  %s3 = inlined_call_operand.hbm [shape: f32[2,2,16], index: 3, kind: output, shape index: {1}]
  %4 = xla_tuple %s2, %s3
  %s5 = sld [smem:[#allocation0]]
  $region61: #{repconv_forward.2} parent=0
    _
  %s7 = ssub.s32 1, %s5
  %s8 = scalar_select 0, %s7, %s5
  $region1: #{repconv_forward.2} parent=0
    #allocation2 [shape = 'u8[131072]{0}', space=vmem, size = 0x20000, scoped, tag = 'input window, operand 0']
    #allocation3 [shape = 's32[2]{0}', space=sflag, size = 0x8, scoped, tag = 'scoped memory for repconv_forward.2']
    #allocation4 [shape = 's32[2]{0}', space=sflag, size = 0x8, scoped, tag = 'scoped memory for repconv_forward.2']
    #allocation5 [shape = 'u8[10240]{0}', space=vmem, size = 0x2800, scoped, tag = 'input window, operand 1, single buffered']
    #allocation6 [shape = 's32[1]{0}', space=sflag, size = 0x4, scoped, tag = 'scoped memory for repconv_forward.2']
    #allocation7 [shape = 'u8[131072]{0}', space=vmem, size = 0x20000, scoped, tag = 'output window, operand 0']
    #allocation8 [shape = 'u8[2048]{0}', space=vmem, size = 0x800, scoped, tag = 'output window, operand 1']
    #allocation9 [shape = 's32[2]{0}', space=sflag, size = 0x8, scoped, tag = 'scoped memory for repconv_forward.2']
    %9 = vsyncpa [#allocation3], 0
    %s10 = scalar_lea.sflag [#allocation3], 1
    %11 = vsyncpa %s10, 0
    %12 = vsyncpa [#allocation6], 0
    %13 = vsyncpa [#allocation4], 0
    %s14 = scalar_lea.sflag [#allocation4], 1
    %15 = vsyncpa %s14, 0
    %16 = vsyncpa [#allocation9], 0
    %s17 = scalar_lea.sflag [#allocation9], 1
    %18 = vsyncpa %s17, 0
    loop: start=0, step=1, limit=4
    $region2: #{repconv_forward.2} parent=1 // loop_pre_header
      _
    $region3: #{repconv_forward.2} parent=1 // loop_header
      %s20 = sphi 0, %s24
      %p21 = scmp.ge.s32.totalorder %s20, 4
      %s27 = sphi 0, %s39
      %s28 = sphi 0, %s35
      %s29 = sphi 0, %s27
      %s30 = sphi 0, %s28
      %s31 = sphi 0, %s29
      %s32 = sphi 0, %s30
      %s44 = sphi 0, %s46
      %s47 = sphi 0, %s44
      %s48 = sphi 0, %s47
      %s64 = sphi 0, %s48
      %s68 = sphi 0, %s68
      %s70 = sphi 0, %s68
      %s71 = sphi 0, %s70
      %s85 = sphi 0, %s71
      %s93 = sphi 0, %s95
      %s96 = sphi 0, %s93
      %s97 = sphi 0, %s96
      %s113 = sphi 0, %s97
      %s119 = sphi 0, %s121
      %s122 = sphi 0, %s119
      %s123 = sphi 0, %s122
      %s139 = sphi 0, %s123
    $region4: #{repconv_forward.2} parent=1 // loop_header_branch
      %23 = sbr.rel (%p21) target = $region8
    $region5: #{repconv_forward.2} parent=1 // loop_body
      %s25 = ssub.s32 %s20, 1
      %s26 = ssub.s32 %s20, 2
      %s33 = sadd.s32 1, %s28
      %p34 = scmp.ge.s32.totalorder %s33, 1
      %s35 = scalar_select %p34, 0, %s33
      %s36 = sadd.s32 1, %s27
      %s37 = scalar_select %p34, %s36, %s27
      %p38 = scmp.ge.s32.totalorder %s37, 2
      %s39 = scalar_select %p38, 0, %s37
      %s40 = sadd.s32 %s27, %s28
      %s41 = sadd.s32 %s39, %s35
      %s42 = ssub.s32 %s40, %s41
      %p43 = scmp.eq.s32.totalorder %s42, 0
      %s45 = sadd.s32 %s44, 1
      %s46 = scalar_select %p43, %s44, %s45
      %p49 = pneg %p43
      %p50 = scmp.eq.s32.totalorder %s20, 1
      %p51 = por %p49, %p50
      %p52 = scmp.ne.s32.totalorder %s44, %s47
      %p53 = scmp.eq.s32.totalorder %s20, 0
      %p54 = por %p52, %p53
      %p55 = scmp.ne.s32.totalorder %s44, %s47
      %p56 = scmp.eq.s32.totalorder %s25, 1
      %p57 = por %p55, %p56
      %p58 = scmp.ne.s32.totalorder %s47, %s48
      %p59 = scmp.eq.s32.totalorder %s25, 0
      %p60 = por %p58, %p59
      %p61 = scmp.ne.s32.totalorder %s47, %s48
      %p62 = scmp.eq.s32.totalorder %s26, 1
      %p63 = por %p61, %p62
      %p65 = scmp.ne.s32.totalorder %s48, %s64
      %p66 = scmp.eq.s32.totalorder %s26, 0
      %p67 = por %p65, %p66
      %s69 = sadd.s32 %s68, 1
      %p72 = scmp.eq.s32.totalorder %s20, 1
      %p73 = scmp.ne.s32.totalorder %s68, %s70
      %p74 = scmp.eq.s32.totalorder %s20, 0
      %p75 = por %p73, %p74
      %p76 = scmp.ne.s32.totalorder %s68, %s70
      %p77 = scmp.eq.s32.totalorder %s25, 1
      %p78 = por %p76, %p77
      %p79 = scmp.ne.s32.totalorder %s70, %s71
      %p80 = scmp.eq.s32.totalorder %s25, 0
      %p81 = por %p79, %p80
      %p82 = scmp.ne.s32.totalorder %s70, %s71
      %p83 = scmp.eq.s32.totalorder %s26, 1
      %p84 = por %p82, %p83
      %p86 = scmp.ne.s32.totalorder %s71, %s85
      %p87 = scmp.eq.s32.totalorder %s26, 0
      %p88 = por %p86, %p87
      %s89 = sadd.s32 %s27, %s28
      %s90 = sadd.s32 %s39, %s35
      %s91 = ssub.s32 %s89, %s90
      %p92 = scmp.eq.s32.totalorder %s91, 0
      %s94 = sadd.s32 %s93, 1
      %s95 = scalar_select %p92, %s93, %s94
      %p98 = pneg %p92
      %p99 = scmp.eq.s32.totalorder %s20, 1
      %p100 = por %p98, %p99
      %p101 = scmp.ne.s32.totalorder %s93, %s96
      %p102 = scmp.eq.s32.totalorder %s20, 0
      %p103 = por %p101, %p102
      %p104 = scmp.ne.s32.totalorder %s93, %s96
      %p105 = scmp.eq.s32.totalorder %s25, 1
      %p106 = por %p104, %p105
      %p107 = scmp.ne.s32.totalorder %s96, %s97
      %p108 = scmp.eq.s32.totalorder %s25, 0
      %p109 = por %p107, %p108
      %p110 = scmp.ne.s32.totalorder %s96, %s97
      %p111 = scmp.eq.s32.totalorder %s26, 1
      %p112 = por %p110, %p111
      %p114 = scmp.ne.s32.totalorder %s97, %s113
      %p115 = scmp.eq.s32.totalorder %s26, 0
      %p116 = por %p114, %p115
      %s117 = ssub.s32 %s27, %s39
      %p118 = scmp.eq.s32.totalorder %s117, 0
      %s120 = sadd.s32 %s119, 1
      %s121 = scalar_select %p118, %s119, %s120
      %p124 = pneg %p118
      %p125 = scmp.eq.s32.totalorder %s20, 1
      %p126 = por %p124, %p125
      %p127 = scmp.ne.s32.totalorder %s119, %s122
      %p128 = scmp.eq.s32.totalorder %s20, 0
      %p129 = por %p127, %p128
      %p130 = scmp.ne.s32.totalorder %s119, %s122
      %p131 = scmp.eq.s32.totalorder %s25, 1
      %p132 = por %p130, %p131
      %p133 = scmp.ne.s32.totalorder %s122, %s123
      %p134 = scmp.eq.s32.totalorder %s25, 0
      %p135 = por %p133, %p134
      %p136 = scmp.ne.s32.totalorder %s122, %s123
      %p137 = scmp.eq.s32.totalorder %s26, 1
      %p138 = por %p136, %p137
      %p140 = scmp.ne.s32.totalorder %s123, %s139
      %p141 = scmp.eq.s32.totalorder %s26, 0
      %p142 = por %p140, %p141
      %p143 = scmp.le.s32.totalorder 1, %s20
      %p144 = scmp.lt.s32.totalorder %s20, 3
      %p145 = pnand %p143, %p144
      %p146 = pneg %p145
      // Predicated region
      $region9: #{repconv_forward.2} parent=5 // pred_check
        _
      $region10: #{repconv_forward.2} parent=5 // pred_check_branch
        %148 = sbr.rel (%p145) target = $region12
      $region11: #{repconv_forward.2} parent=5 // pred_region
        %s149 = ssub.s32 %s20, 1
        // Predicated region
        $region13: #{repconv_forward.2} parent=11 // pred_check
          %p150 = pneg %p81
        $region14: #{repconv_forward.2} parent=11 // pred_check_branch
          %152 = sbr.rel (%p150) target = $region16
        $region15: #{repconv_forward.2} parent=11 // pred_region
          %s154 = ssub.s32 320, 320
          %155 = vsyncadd [#allocation6], %s154
          %s156 = sshll.u32 [#allocation5], 4
          %s157 = int_to_ptr.vmem [resolvable:$true] %s156
          %162 = dma.hbm_to_vmem [thread:$0]  %s1, 320, %s157, [#allocation6], 64, 64, 4
        $region16: #{repconv_forward.2} parent=11 // pred_fallthru
          _
      $region12: #{repconv_forward.2} parent=5 // pred_fallthru
        _
      %p163 = scmp.lt.s32.totalorder %s20, 2
      // Predicated region
      $region17: #{repconv_forward.2} parent=5 // pred_check
        %p164 = pneg %p163
      $region18: #{repconv_forward.2} parent=5 // pred_check_branch
        %166 = sbr.rel (%p164) target = $region20
      $region19: #{repconv_forward.2} parent=5 // pred_region
        // Predicated region
        $region21: #{repconv_forward.2} parent=19 // pred_check
          %p167 = pneg %p54
        $region22: #{repconv_forward.2} parent=19 // pred_check_branch
          %169 = sbr.rel (%p167) target = $region24
        $region23: #{repconv_forward.2} parent=19 // pred_region
          %s170 = sand.u32 %s44, 1
          %s171 = scalar_lea.sflag [#allocation3], %s170
          %s172 = sand.u32 %s44, 1
          %s173 = smul.addr %s172, 128
          %s174 = scalar_lea.vmem [#allocation2], %s173
          %s175 = sadd.s32 %s27, %s28
          %s176 = smul.u32 32, %s175
          %s178 = ssub.s32 2048, 2048
          %179 = vsyncadd %s171, %s178
          %s180 = smul.addr %s176, 64
          %s181 = scalar_lea.hbm %s0, %s180
          %s182 = sshll.u32 %s174, 4
          %s183 = int_to_ptr.vmem [resolvable:$true] %s182
          %188 = dma.hbm_to_vmem [thread:$0]  %s181, 2048, %s183, %s171, 64, 64, 4
        $region24: #{repconv_forward.2} parent=19 // pred_fallthru
          _
      $region20: #{repconv_forward.2} parent=5 // pred_fallthru
        _
      %p189 = scmp.le.s32.totalorder 1, %s20
      %p190 = scmp.lt.s32.totalorder %s20, 3
      %p191 = pnand %p189, %p190
      %p192 = pneg %p191
      // Predicated region
      $region25: #{repconv_forward.2} parent=5 // pred_check
        _
      $region26: #{repconv_forward.2} parent=5 // pred_check_branch
        %194 = sbr.rel (%p191) target = $region28
      $region27: #{repconv_forward.2} parent=5 // pred_region
        %s195 = ssub.s32 %s20, 1
        %s196 = sand.u32 %s47, 1
        %s197 = scalar_lea.sflag [#allocation3], %s196
        %s198 = sand.u32 %s47, 1
        %s199 = smul.addr %s198, 128
        %s200 = scalar_lea.vmem [#allocation2], %s199
        // Predicated region
        $region29: #{repconv_forward.2} parent=27 // pred_check
          %p201 = pneg %p60
        $region30: #{repconv_forward.2} parent=27 // pred_check_branch
          %203 = sbr.rel (%p201) target = $region32
        $region31: #{repconv_forward.2} parent=27 // pred_region
          %204 = dma.done %s197, 2048
        $region32: #{repconv_forward.2} parent=27 // pred_fallthru
          _
        // Predicated region
        $region33: #{repconv_forward.2} parent=27 // pred_check
          %p205 = pneg %p81
        $region34: #{repconv_forward.2} parent=27 // pred_check_branch
          %207 = sbr.rel (%p205) target = $region36
        $region35: #{repconv_forward.2} parent=27 // pred_region
          %208 = dma.done [#allocation6], 320
        $region36: #{repconv_forward.2} parent=27 // pred_fallthru
          _
        %s209 = sand.u32 %s47, 1
        %s210 = scalar_lea.sflag [#allocation3], %s209
        %s211 = sand.u32 %s47, 1
        %s212 = smul.addr %s211, 128
        %s213 = scalar_lea.vmem [#allocation2], %s212
        %p214 = pneg %p60
        %p215 = pneg %p57
        %p216 = pneg %p81
        %p217 = pneg %p78
        %p218 = pneg %p109
        %p219 = pneg %p106
        %s220 = sand.u32 %s96, 1
        %s221 = scalar_lea.sflag [#allocation4], %s220
        %s222 = sand.u32 %s96, 1
        %s223 = smul.addr %s222, 128
        %s224 = scalar_lea.vmem [#allocation7], %s223
        %p225 = pneg %p135
        %p226 = pneg %p132
        %s227 = sand.u32 %s122, 1
        %s228 = scalar_lea.sflag [#allocation9], %s227
        %s229 = sand.u32 %s122, 1
        %s230 = smul.addr %s229, 2
        %s231 = scalar_lea.vmem [#allocation8], %s230
        %s232 = sadd.s32 %s29, %s30
        %s233 = smul.u32 32, %s232
        %s234 = sadd.s32 %s29, %s30
        %s235 = smul.u32 32, %s234
        %v237 = vld [vmem:[%s200] sm:$0xf]
        %v238 = vld [vmem:[%s200 + $0x4] sm:$0xf]
        %v239 = vld [vmem:[%s200 + $0x8] sm:$0xf]
        %v240 = vld [vmem:[%s200 + $0xc] sm:$0xf]
        %v241 = vld [vmem:[%s200 + $0x10] sm:$0xf]
        %v242 = vld [vmem:[%s200 + $0x14] sm:$0xf]
        %v243 = vld [vmem:[%s200 + $0x18] sm:$0xf]
        %v244 = vld [vmem:[%s200 + $0x1c] sm:$0xf]
        %v245 = vld [vmem:[%s200 + $0x20] sm:$0xf]
        %v246 = vld [vmem:[%s200 + $0x24] sm:$0xf]
        %v247 = vld [vmem:[%s200 + $0x28] sm:$0xf]
        %v248 = vld [vmem:[%s200 + $0x2c] sm:$0xf]
        %v249 = vld [vmem:[%s200 + $0x30] sm:$0xf]
        %v250 = vld [vmem:[%s200 + $0x34] sm:$0xf]
        %v251 = vld [vmem:[%s200 + $0x38] sm:$0xf]
        %v252 = vld [vmem:[%s200 + $0x3c] sm:$0xf]
        %v253 = vld [vmem:[%s200 + $0x40] sm:$0xf]
        %v254 = vld [vmem:[%s200 + $0x44] sm:$0xf]
        %v255 = vld [vmem:[%s200 + $0x48] sm:$0xf]
        %v256 = vld [vmem:[%s200 + $0x4c] sm:$0xf]
        %v257 = vld [vmem:[%s200 + $0x50] sm:$0xf]
        %v258 = vld [vmem:[%s200 + $0x54] sm:$0xf]
        %v259 = vld [vmem:[%s200 + $0x58] sm:$0xf]
        %v260 = vld [vmem:[%s200 + $0x5c] sm:$0xf]
        %v261 = vld [vmem:[%s200 + $0x60] sm:$0xf]
        %v262 = vld [vmem:[%s200 + $0x64] sm:$0xf]
        %v263 = vld [vmem:[%s200 + $0x68] sm:$0xf]
        %v264 = vld [vmem:[%s200 + $0x6c] sm:$0xf]
        %v265 = vld [vmem:[%s200 + $0x70] sm:$0xf]
        %v266 = vld [vmem:[%s200 + $0x74] sm:$0xf]
        %v267 = vld [vmem:[%s200 + $0x78] sm:$0xf]
        %v268 = vld [vmem:[%s200 + $0x7c] sm:$0xf]
        %v269 = vld [vmem:[#allocation5] sm:$0xf]
        %v270 = vld [vmem:[#allocation5 + $0x4] sm:$0xf]
        %v271 = vld [vmem:[#allocation5 + $0x8] sm:$0xf]
        %v272 = vld [vmem:[#allocation5 + $0xc] sm:$0xf]
        %v273 = vld [vmem:[#allocation5 + $0x10] sm:$0x3]
        %v306 = vunpack.c.l.b16 %v237
        %v307 = vunpack.c.l.b16 %v238
        %v308 = vunpack.c.l.b16 %v239
        %v309 = vunpack.c.l.b16 %v240
        %v310 = vunpack.c.l.b16 %v241
        %v311 = vunpack.c.l.b16 %v242
        %v312 = vunpack.c.l.b16 %v243
        %v313 = vunpack.c.l.b16 %v244
        %v314 = vunpack.c.l.b16 %v245
        %v315 = vunpack.c.l.b16 %v246
        %v316 = vunpack.c.l.b16 %v247
        %v317 = vunpack.c.l.b16 %v248
        %v318 = vunpack.c.l.b16 %v249
        %v319 = vunpack.c.l.b16 %v250
        %v320 = vunpack.c.l.b16 %v251
        %v321 = vunpack.c.l.b16 %v252
        %v322 = vunpack.c.l.b16 %v253
        %v323 = vunpack.c.l.b16 %v254
        %v324 = vunpack.c.l.b16 %v255
        %v325 = vunpack.c.l.b16 %v256
        %v326 = vunpack.c.l.b16 %v257
        %v327 = vunpack.c.l.b16 %v258
        %v328 = vunpack.c.l.b16 %v259
        %v329 = vunpack.c.l.b16 %v260
        %v330 = vunpack.c.l.b16 %v261
        %v331 = vunpack.c.l.b16 %v262
        %v332 = vunpack.c.l.b16 %v263
        %v333 = vunpack.c.l.b16 %v264
        %v334 = vunpack.c.l.b16 %v265
        %v335 = vunpack.c.l.b16 %v266
        %v336 = vunpack.c.l.b16 %v267
        %v337 = vunpack.c.l.b16 %v268
        %v338 = vpack.c.b16 %v307, %v306
        %v339 = vpack.c.b16 %v309, %v308
        %v340 = vpack.c.b16 %v311, %v310
        %v341 = vpack.c.b16 %v313, %v312
        %v342 = vpack.c.b16 %v315, %v314
        %v343 = vpack.c.b16 %v317, %v316
        %v344 = vpack.c.b16 %v319, %v318
        %v345 = vpack.c.b16 %v321, %v320
        %v346 = vpack.c.b16 %v323, %v322
        %v347 = vpack.c.b16 %v325, %v324
        %v348 = vpack.c.b16 %v327, %v326
        %v349 = vpack.c.b16 %v329, %v328
        %v350 = vpack.c.b16 %v331, %v330
        %v351 = vpack.c.b16 %v333, %v332
        %v352 = vpack.c.b16 %v335, %v334
        %v353 = vpack.c.b16 %v337, %v336
        %v359 = vunpack.c.l.b16 %v269
        %v360 = vunpack.c.l.b16 %v270
        %v361 = vunpack.c.l.b16 %v271
        %v362 = vunpack.c.l.b16 %v272
        %v363 = vunpack.c.l.b16 %v273
        %v364 = vpack.c.b16 %v360, %v359
        %v365 = vpack.c.b16 %v362, %v361
        %v366 = vpack.c.b16 %v363, %v363
        %vm369 = vcmask 293888
        %v371 = vsel %vm369, %v338, 0
        %v374 = vsel %vm369, %v339, 0
        %v377 = vsel %vm369, %v340, 0
        %v380 = vsel %vm369, %v341, 0
        %v383 = vsel %vm369, %v342, 0
        %v386 = vsel %vm369, %v343, 0
        %v389 = vsel %vm369, %v344, 0
        %v392 = vsel %vm369, %v345, 0
        %v395 = vsel %vm369, %v346, 0
        %v398 = vsel %vm369, %v347, 0
        %v401 = vsel %vm369, %v348, 0
        %v404 = vsel %vm369, %v349, 0
        %v407 = vsel %vm369, %v350, 0
        %v410 = vsel %vm369, %v351, 0
        %v413 = vsel %vm369, %v352, 0
        %v416 = vsel %vm369, %v353, 0
        %vm418 = vcmask 1041408
        %v420 = vsel %vm418, %v366, 0
        %422 = vmatprep.subr.bf16.mxu0 0
        %423 = vmatpush1.bf16.msra.mxu0 %v364
        %424 = vmatprep.subr.bf16.mxu0 0
        %425 = vmatpush1.bf16.msra.mxu0 %v365
        %426 = vmatprep.subr.bf16.mxu0 0
        %427 = vmatpush1.bf16.msra.mxu0 %v420
        %428 = vmatprep.subr.bf16.mxu0 0
        %429 = vmatpush1.bf16.msra.mxu0 0
        %430 = vmatprep.subr.bf16.mxu0 0
        %431 = vmatpush1.bf16.msra.mxu0 0
        %432 = vmatprep.subr.bf16.mxu0 0
        %433 = vmatpush1.bf16.msra.mxu0 0
        %434 = vmatprep.subr.bf16.mxu0 0
        %435 = vmatpush1.bf16.msra.mxu0 0
        %436 = vmatprep.subr.bf16.mxu0 0
        %437 = vmatpush1.bf16.msra.mxu0 0
        %438 = vmatprep.subr.bf16.mxu0 0
        %439 = vmatpush1.bf16.msra.mxu0 0
        %440 = vmatprep.subr.bf16.mxu0 0
        %441 = vmatpush1.bf16.msra.mxu0 0
        %442 = vmatprep.subr.bf16.mxu0 0
        %443 = vmatpush1.bf16.msra.mxu0 0
        %444 = vmatprep.subr.bf16.mxu0 0
        %445 = vmatpush1.bf16.msra.mxu0 0
        %446 = vmatprep.subr.bf16.mxu0 0
        %447 = vmatpush1.bf16.msra.mxu0 0
        %448 = vmatprep.subr.bf16.mxu0 0
        %449 = vmatpush1.bf16.msra.mxu0 0
        %450 = vmatprep.subr.bf16.mxu0 0
        %451 = vmatpush1.bf16.msra.mxu0 0
        %452 = vmatprep.subr.bf16.mxu0 0
        %453 = vmatpush1.bf16.msra.mxu0 0
        %454 = vmatprep.mubr.bf16.mxu0 0
        %455 = vmatmul.mubr.bf16.gmra.mrb[0].mxu0 %v371
        %v456 = vpop.f32.mrb[0].mxu0
        %v457 = vadd.f32 0.0, %v456
        %v458 = vpop.f32.mrb[0].mxu0
        %v459 = vpop.f32.mrb[0].mxu0
        %v460 = vadd.f32 0.0, %v459
        %v461 = vpop.f32.mrb[0].mxu0
        %462 = vmatprep.mubr.bf16.mxu0 0
        %463 = vmatmul.mubr.bf16.gmra.mrb[0].mxu0 %v374
        %v464 = vpop.f32.mrb[0].mxu0
        %v465 = vadd.f32 0.0, %v464
        %v466 = vpop.f32.mrb[0].mxu0
        %v467 = vpop.f32.mrb[0].mxu0
        %v468 = vadd.f32 0.0, %v467
        %v469 = vpop.f32.mrb[0].mxu0
        %470 = vmatprep.mubr.bf16.mxu0 0
        %471 = vmatmul.mubr.bf16.gmra.mrb[0].mxu0 %v377
        %v472 = vpop.f32.mrb[0].mxu0
        %v473 = vadd.f32 0.0, %v472
        %v474 = vpop.f32.mrb[0].mxu0
        %v475 = vpop.f32.mrb[0].mxu0
        %v476 = vadd.f32 0.0, %v475
        %v477 = vpop.f32.mrb[0].mxu0
        %478 = vmatprep.mubr.bf16.mxu0 0
        %479 = vmatmul.mubr.bf16.gmra.mrb[0].mxu0 %v380
        %v480 = vpop.f32.mrb[0].mxu0
        %v481 = vadd.f32 0.0, %v480
        %v482 = vpop.f32.mrb[0].mxu0
        %v483 = vpop.f32.mrb[0].mxu0
        %v484 = vadd.f32 0.0, %v483
        %v485 = vpop.f32.mrb[0].mxu0
        %486 = vmatprep.mubr.bf16.mxu0 0
        %487 = vmatmul.mubr.bf16.gmra.mrb[0].mxu0 %v383
        %v488 = vpop.f32.mrb[0].mxu0
        %v489 = vadd.f32 0.0, %v488
        %v490 = vpop.f32.mrb[0].mxu0
        %v491 = vpop.f32.mrb[0].mxu0
        %v492 = vadd.f32 0.0, %v491
        %v493 = vpop.f32.mrb[0].mxu0
        %494 = vmatprep.mubr.bf16.mxu0 0
        %495 = vmatmul.mubr.bf16.gmra.mrb[0].mxu0 %v386
        %v496 = vpop.f32.mrb[0].mxu0
        %v497 = vadd.f32 0.0, %v496
        %v498 = vpop.f32.mrb[0].mxu0
        %v499 = vpop.f32.mrb[0].mxu0
        %v500 = vadd.f32 0.0, %v499
        %v501 = vpop.f32.mrb[0].mxu0
        %502 = vmatprep.mubr.bf16.mxu0 0
        %503 = vmatmul.mubr.bf16.gmra.mrb[0].mxu0 %v389
        %v504 = vpop.f32.mrb[0].mxu0
        %v505 = vadd.f32 0.0, %v504
        %v506 = vpop.f32.mrb[0].mxu0
        %v507 = vpop.f32.mrb[0].mxu0
        %v508 = vadd.f32 0.0, %v507
        %v509 = vpop.f32.mrb[0].mxu0
        %510 = vmatprep.mubr.bf16.mxu0 0
        %511 = vmatmul.mubr.bf16.gmra.mrb[0].mxu0 %v392
        %v512 = vpop.f32.mrb[0].mxu0
        %v513 = vadd.f32 0.0, %v512
        %v514 = vpop.f32.mrb[0].mxu0
        %v515 = vpop.f32.mrb[0].mxu0
        %v516 = vadd.f32 0.0, %v515
        %v517 = vpop.f32.mrb[0].mxu0
        %518 = vmatprep.mubr.bf16.mxu0 0
        %519 = vmatmul.mubr.bf16.gmra.mrb[0].mxu0 %v395
        %v520 = vpop.f32.mrb[0].mxu0
        %v521 = vadd.f32 0.0, %v520
        %v522 = vpop.f32.mrb[0].mxu0
        %v523 = vpop.f32.mrb[0].mxu0
        %v524 = vadd.f32 0.0, %v523
        %v525 = vpop.f32.mrb[0].mxu0
        %526 = vmatprep.mubr.bf16.mxu0 0
        %527 = vmatmul.mubr.bf16.gmra.mrb[0].mxu0 %v398
        %v528 = vpop.f32.mrb[0].mxu0
        %v529 = vadd.f32 0.0, %v528
        %v530 = vpop.f32.mrb[0].mxu0
        %v531 = vpop.f32.mrb[0].mxu0
        %v532 = vadd.f32 0.0, %v531
        %v533 = vpop.f32.mrb[0].mxu0
        %534 = vmatprep.mubr.bf16.mxu0 0
        %535 = vmatmul.mubr.bf16.gmra.mrb[0].mxu0 %v401
        %v536 = vpop.f32.mrb[0].mxu0
        %v537 = vadd.f32 0.0, %v536
        %v538 = vpop.f32.mrb[0].mxu0
        %v539 = vpop.f32.mrb[0].mxu0
        %v540 = vadd.f32 0.0, %v539
        %v541 = vpop.f32.mrb[0].mxu0
        %542 = vmatprep.mubr.bf16.mxu0 0
        %543 = vmatmul.mubr.bf16.gmra.mrb[0].mxu0 %v404
        %v544 = vpop.f32.mrb[0].mxu0
        %v545 = vadd.f32 0.0, %v544
        %v546 = vpop.f32.mrb[0].mxu0
        %v547 = vpop.f32.mrb[0].mxu0
        %v548 = vadd.f32 0.0, %v547
        %v549 = vpop.f32.mrb[0].mxu0
        %550 = vmatprep.mubr.bf16.mxu0 0
        %551 = vmatmul.mubr.bf16.gmra.mrb[0].mxu0 %v407
        %v552 = vpop.f32.mrb[0].mxu0
        %v553 = vadd.f32 0.0, %v552
        %v554 = vpop.f32.mrb[0].mxu0
        %v555 = vpop.f32.mrb[0].mxu0
        %v556 = vadd.f32 0.0, %v555
        %v557 = vpop.f32.mrb[0].mxu0
        %558 = vmatprep.mubr.bf16.mxu0 0
        %559 = vmatmul.mubr.bf16.gmra.mrb[0].mxu0 %v410
        %v560 = vpop.f32.mrb[0].mxu0
        %v561 = vadd.f32 0.0, %v560
        %v562 = vpop.f32.mrb[0].mxu0
        %v563 = vpop.f32.mrb[0].mxu0
        %v564 = vadd.f32 0.0, %v563
        %v565 = vpop.f32.mrb[0].mxu0
        %566 = vmatprep.mubr.bf16.mxu0 0
        %567 = vmatmul.mubr.bf16.gmra.mrb[0].mxu0 %v413
        %v568 = vpop.f32.mrb[0].mxu0
        %v569 = vadd.f32 0.0, %v568
        %v570 = vpop.f32.mrb[0].mxu0
        %v571 = vpop.f32.mrb[0].mxu0
        %v572 = vadd.f32 0.0, %v571
        %v573 = vpop.f32.mrb[0].mxu0
        %574 = vmatprep.mubr.bf16.mxu0 0
        %575 = vmatmul.mubr.bf16.gmra.mrb[0].mxu0 %v416
        %v576 = vpop.f32.mrb[0].mxu0
        %v577 = vadd.f32 0.0, %v576
        %v578 = vpop.f32.mrb[0].mxu0
        %v579 = vpop.f32.mrb[0].mxu0
        %v580 = vadd.f32 0.0, %v579
        %v581 = vpop.f32.mrb[0].mxu0
        %582 = vdwg.mxu0
        %v583 = vpack.c.bf16 %v460, %v457
        %v584 = vpack.c.bf16 %v468, %v465
        %v585 = vpack.c.bf16 %v476, %v473
        %v586 = vpack.c.bf16 %v484, %v481
        %v587 = vpack.c.bf16 %v492, %v489
        %v588 = vpack.c.bf16 %v500, %v497
        %v589 = vpack.c.bf16 %v508, %v505
        %v590 = vpack.c.bf16 %v516, %v513
        %v591 = vpack.c.bf16 %v524, %v521
        %v592 = vpack.c.bf16 %v532, %v529
        %v593 = vpack.c.bf16 %v540, %v537
        %v594 = vpack.c.bf16 %v548, %v545
        %v595 = vpack.c.bf16 %v556, %v553
        %v596 = vpack.c.bf16 %v564, %v561
        %v597 = vpack.c.bf16 %v572, %v569
        %v598 = vpack.c.bf16 %v580, %v577
        %v615 = vunpack.c.l.b16 %v583
        %v616 = vunpack.c.h.b16 %v583
        %v617 = vunpack.c.l.b16 %v584
        %v618 = vunpack.c.h.b16 %v584
        %v619 = vunpack.c.l.b16 %v585
        %v620 = vunpack.c.h.b16 %v585
        %v621 = vunpack.c.l.b16 %v586
        %v622 = vunpack.c.h.b16 %v586
        %v623 = vunpack.c.l.b16 %v587
        %v624 = vunpack.c.h.b16 %v587
        %v625 = vunpack.c.l.b16 %v588
        %v626 = vunpack.c.h.b16 %v588
        %v627 = vunpack.c.l.b16 %v589
        %v628 = vunpack.c.h.b16 %v589
        %v629 = vunpack.c.l.b16 %v590
        %v630 = vunpack.c.h.b16 %v590
        %v631 = vunpack.c.l.b16 %v591
        %v632 = vunpack.c.h.b16 %v591
        %v633 = vunpack.c.l.b16 %v592
        %v634 = vunpack.c.h.b16 %v592
        %v635 = vunpack.c.l.b16 %v593
        %v636 = vunpack.c.h.b16 %v593
        %v637 = vunpack.c.l.b16 %v594
        %v638 = vunpack.c.h.b16 %v594
        %v639 = vunpack.c.l.b16 %v595
        %v640 = vunpack.c.h.b16 %v595
        %v641 = vunpack.c.l.b16 %v596
        %v642 = vunpack.c.h.b16 %v596
        %v643 = vunpack.c.l.b16 %v597
        %v644 = vunpack.c.h.b16 %v597
        %v645 = vunpack.c.l.b16 %v598
        %v646 = vunpack.c.h.b16 %v598
        %v647 = vpack.c.b16 %v615, %v615
        %v648 = vpack.c.b16 %v616, %v616
        %v649 = vpack.c.b16 %v617, %v617
        %v650 = vpack.c.b16 %v618, %v618
        %v651 = vpack.c.b16 %v619, %v619
        %v652 = vpack.c.b16 %v620, %v620
        %v653 = vpack.c.b16 %v621, %v621
        %v654 = vpack.c.b16 %v622, %v622
        %v655 = vpack.c.b16 %v623, %v623
        %v656 = vpack.c.b16 %v624, %v624
        %v657 = vpack.c.b16 %v625, %v625
        %v658 = vpack.c.b16 %v626, %v626
        %v659 = vpack.c.b16 %v627, %v627
        %v660 = vpack.c.b16 %v628, %v628
        %v661 = vpack.c.b16 %v629, %v629
        %v662 = vpack.c.b16 %v630, %v630
        %v663 = vpack.c.b16 %v631, %v631
        %v664 = vpack.c.b16 %v632, %v632
        %v665 = vpack.c.b16 %v633, %v633
        %v666 = vpack.c.b16 %v634, %v634
        %v667 = vpack.c.b16 %v635, %v635
        %v668 = vpack.c.b16 %v636, %v636
        %v669 = vpack.c.b16 %v637, %v637
        %v670 = vpack.c.b16 %v638, %v638
        %v671 = vpack.c.b16 %v639, %v639
        %v672 = vpack.c.b16 %v640, %v640
        %v673 = vpack.c.b16 %v641, %v641
        %v674 = vpack.c.b16 %v642, %v642
        %v675 = vpack.c.b16 %v643, %v643
        %v676 = vpack.c.b16 %v644, %v644
        %v677 = vpack.c.b16 %v645, %v645
        %v678 = vpack.c.b16 %v646, %v646
        %vm711 = vcmask 125952
        %712 = vst.msk [vmem:[%s224] sm:$0xf] %vm711, %v647
        %713 = vst.msk [vmem:[%s224 + $0x4] sm:$0xf] %vm711, %v648
        %714 = vst.msk [vmem:[%s224 + $0x8] sm:$0xf] %vm711, %v649
        %715 = vst.msk [vmem:[%s224 + $0xc] sm:$0xf] %vm711, %v650
        %716 = vst.msk [vmem:[%s224 + $0x10] sm:$0xf] %vm711, %v651
        %717 = vst.msk [vmem:[%s224 + $0x14] sm:$0xf] %vm711, %v652
        %718 = vst.msk [vmem:[%s224 + $0x18] sm:$0xf] %vm711, %v653
        %719 = vst.msk [vmem:[%s224 + $0x1c] sm:$0xf] %vm711, %v654
        %720 = vst.msk [vmem:[%s224 + $0x20] sm:$0xf] %vm711, %v655
        %721 = vst.msk [vmem:[%s224 + $0x24] sm:$0xf] %vm711, %v656
        %722 = vst.msk [vmem:[%s224 + $0x28] sm:$0xf] %vm711, %v657
        %723 = vst.msk [vmem:[%s224 + $0x2c] sm:$0xf] %vm711, %v658
        %724 = vst.msk [vmem:[%s224 + $0x30] sm:$0xf] %vm711, %v659
        %725 = vst.msk [vmem:[%s224 + $0x34] sm:$0xf] %vm711, %v660
        %726 = vst.msk [vmem:[%s224 + $0x38] sm:$0xf] %vm711, %v661
        %727 = vst.msk [vmem:[%s224 + $0x3c] sm:$0xf] %vm711, %v662
        %728 = vst.msk [vmem:[%s224 + $0x40] sm:$0xf] %vm711, %v663
        %729 = vst.msk [vmem:[%s224 + $0x44] sm:$0xf] %vm711, %v664
        %730 = vst.msk [vmem:[%s224 + $0x48] sm:$0xf] %vm711, %v665
        %731 = vst.msk [vmem:[%s224 + $0x4c] sm:$0xf] %vm711, %v666
        %732 = vst.msk [vmem:[%s224 + $0x50] sm:$0xf] %vm711, %v667
        %733 = vst.msk [vmem:[%s224 + $0x54] sm:$0xf] %vm711, %v668
        %734 = vst.msk [vmem:[%s224 + $0x58] sm:$0xf] %vm711, %v669
        %735 = vst.msk [vmem:[%s224 + $0x5c] sm:$0xf] %vm711, %v670
        %736 = vst.msk [vmem:[%s224 + $0x60] sm:$0xf] %vm711, %v671
        %737 = vst.msk [vmem:[%s224 + $0x64] sm:$0xf] %vm711, %v672
        %738 = vst.msk [vmem:[%s224 + $0x68] sm:$0xf] %vm711, %v673
        %739 = vst.msk [vmem:[%s224 + $0x6c] sm:$0xf] %vm711, %v674
        %740 = vst.msk [vmem:[%s224 + $0x70] sm:$0xf] %vm711, %v675
        %741 = vst.msk [vmem:[%s224 + $0x74] sm:$0xf] %vm711, %v676
        %742 = vst.msk [vmem:[%s224 + $0x78] sm:$0xf] %vm711, %v677
        %743 = vst.msk [vmem:[%s224 + $0x7c] sm:$0xf] %vm711, %v678
        %p744 = scmp.eq.s32.totalorder %s30, 0
        // Predicated region
        $region37: #{repconv_forward.2} parent=27 // pred_check
          %p745 = pneg %p744
        $region38: #{repconv_forward.2} parent=27 // pred_check_branch
          %747 = sbr.rel (%p745) target = $region40
        $region39: #{repconv_forward.2} parent=27 // pred_region
          %vm748 = vcmask 123904
          %749 = vst.msk [vmem:[%s231] sm:$0x3] %vm748, 0.0
        $region40: #{repconv_forward.2} parent=27 // pred_fallthru
          _
        %vm750 = vcmask 130048
        %v751 = vsel %vm750, %v457, 0.0
        %v752 = vsel %vm750, %v460, 0.0
        %v753 = vadd.f32 %v751, %v752
        %v754 = vsel %vm750, %v465, 0.0
        %v755 = vadd.f32 %v753, %v754
        %v756 = vsel %vm750, %v468, 0.0
        %v757 = vadd.f32 %v755, %v756
        %v758 = vsel %vm750, %v473, 0.0
        %v759 = vadd.f32 %v757, %v758
        %v760 = vsel %vm750, %v476, 0.0
        %v761 = vadd.f32 %v759, %v760
        %v762 = vsel %vm750, %v481, 0.0
        %v763 = vadd.f32 %v761, %v762
        %v764 = vsel %vm750, %v484, 0.0
        %v765 = vadd.f32 %v763, %v764
        %v766 = vsel %vm750, %v489, 0.0
        %v767 = vadd.f32 %v765, %v766
        %v768 = vsel %vm750, %v492, 0.0
        %v769 = vadd.f32 %v767, %v768
        %v770 = vsel %vm750, %v497, 0.0
        %v771 = vadd.f32 %v769, %v770
        %v772 = vsel %vm750, %v500, 0.0
        %v773 = vadd.f32 %v771, %v772
        %v774 = vsel %vm750, %v505, 0.0
        %v775 = vadd.f32 %v773, %v774
        %v776 = vsel %vm750, %v508, 0.0
        %v777 = vadd.f32 %v775, %v776
        %v778 = vsel %vm750, %v513, 0.0
        %v779 = vadd.f32 %v777, %v778
        %v780 = vsel %vm750, %v516, 0.0
        %v781 = vadd.f32 %v779, %v780
        %v782 = vsel %vm750, %v521, 0.0
        %v783 = vadd.f32 %v781, %v782
        %v784 = vsel %vm750, %v524, 0.0
        %v785 = vadd.f32 %v783, %v784
        %v786 = vsel %vm750, %v529, 0.0
        %v787 = vadd.f32 %v785, %v786
        %v788 = vsel %vm750, %v532, 0.0
        %v789 = vadd.f32 %v787, %v788
        %v790 = vsel %vm750, %v537, 0.0
        %v791 = vadd.f32 %v789, %v790
        %v792 = vsel %vm750, %v540, 0.0
        %v793 = vadd.f32 %v791, %v792
        %v794 = vsel %vm750, %v545, 0.0
        %v795 = vadd.f32 %v793, %v794
        %v796 = vsel %vm750, %v548, 0.0
        %v797 = vadd.f32 %v795, %v796
        %v798 = vsel %vm750, %v553, 0.0
        %v799 = vadd.f32 %v797, %v798
        %v800 = vsel %vm750, %v556, 0.0
        %v801 = vadd.f32 %v799, %v800
        %v802 = vsel %vm750, %v561, 0.0
        %v803 = vadd.f32 %v801, %v802
        %v804 = vsel %vm750, %v564, 0.0
        %v805 = vadd.f32 %v803, %v804
        %v806 = vsel %vm750, %v569, 0.0
        %v807 = vadd.f32 %v805, %v806
        %v808 = vsel %vm750, %v572, 0.0
        %v809 = vadd.f32 %v807, %v808
        %v810 = vsel %vm750, %v577, 0.0
        %v811 = vadd.f32 %v809, %v810
        %v812 = vsel %vm750, %v580, 0.0
        %v813 = vadd.f32 %v811, %v812
        %v814 = vrot.slane %v813, 4
        %v815 = vadd.f32 %v813, %v814
        %v816 = vrot.slane %v815, 2
        %v817 = vadd.f32 %v815, %v816
        %v818 = vrot.slane %v817, 1
        %v819 = vadd.f32 %v817, %v818
        %v820 = vmul.f32 %v457, %v457
        %v821 = vmul.f32 %v460, %v460
        %v822 = vmul.f32 %v465, %v465
        %v823 = vmul.f32 %v468, %v468
        %v824 = vmul.f32 %v473, %v473
        %v825 = vmul.f32 %v476, %v476
        %v826 = vmul.f32 %v481, %v481
        %v827 = vmul.f32 %v484, %v484
        %v828 = vmul.f32 %v489, %v489
        %v829 = vmul.f32 %v492, %v492
        %v830 = vmul.f32 %v497, %v497
        %v831 = vmul.f32 %v500, %v500
        %v832 = vmul.f32 %v505, %v505
        %v833 = vmul.f32 %v508, %v508
        %v834 = vmul.f32 %v513, %v513
        %v835 = vmul.f32 %v516, %v516
        %v836 = vmul.f32 %v521, %v521
        %v837 = vmul.f32 %v524, %v524
        %v838 = vmul.f32 %v529, %v529
        %v839 = vmul.f32 %v532, %v532
        %v840 = vmul.f32 %v537, %v537
        %v841 = vmul.f32 %v540, %v540
        %v842 = vmul.f32 %v545, %v545
        %v843 = vmul.f32 %v548, %v548
        %v844 = vmul.f32 %v553, %v553
        %v845 = vmul.f32 %v556, %v556
        %v846 = vmul.f32 %v561, %v561
        %v847 = vmul.f32 %v564, %v564
        %v848 = vmul.f32 %v569, %v569
        %v849 = vmul.f32 %v572, %v572
        %v850 = vmul.f32 %v577, %v577
        %v851 = vmul.f32 %v580, %v580
        %v852 = vsel %vm750, %v820, 0.0
        %v853 = vsel %vm750, %v821, 0.0
        %v854 = vadd.f32 %v852, %v853
        %v855 = vsel %vm750, %v822, 0.0
        %v856 = vadd.f32 %v854, %v855
        %v857 = vsel %vm750, %v823, 0.0
        %v858 = vadd.f32 %v856, %v857
        %v859 = vsel %vm750, %v824, 0.0
        %v860 = vadd.f32 %v858, %v859
        %v861 = vsel %vm750, %v825, 0.0
        %v862 = vadd.f32 %v860, %v861
        %v863 = vsel %vm750, %v826, 0.0
        %v864 = vadd.f32 %v862, %v863
        %v865 = vsel %vm750, %v827, 0.0
        %v866 = vadd.f32 %v864, %v865
        %v867 = vsel %vm750, %v828, 0.0
        %v868 = vadd.f32 %v866, %v867
        %v869 = vsel %vm750, %v829, 0.0
        %v870 = vadd.f32 %v868, %v869
        %v871 = vsel %vm750, %v830, 0.0
        %v872 = vadd.f32 %v870, %v871
        %v873 = vsel %vm750, %v831, 0.0
        %v874 = vadd.f32 %v872, %v873
        %v875 = vsel %vm750, %v832, 0.0
        %v876 = vadd.f32 %v874, %v875
        %v877 = vsel %vm750, %v833, 0.0
        %v878 = vadd.f32 %v876, %v877
        %v879 = vsel %vm750, %v834, 0.0
        %v880 = vadd.f32 %v878, %v879
        %v881 = vsel %vm750, %v835, 0.0
        %v882 = vadd.f32 %v880, %v881
        %v883 = vsel %vm750, %v836, 0.0
        %v884 = vadd.f32 %v882, %v883
        %v885 = vsel %vm750, %v837, 0.0
        %v886 = vadd.f32 %v884, %v885
        %v887 = vsel %vm750, %v838, 0.0
        %v888 = vadd.f32 %v886, %v887
        %v889 = vsel %vm750, %v839, 0.0
        %v890 = vadd.f32 %v888, %v889
        %v891 = vsel %vm750, %v840, 0.0
        %v892 = vadd.f32 %v890, %v891
        %v893 = vsel %vm750, %v841, 0.0
        %v894 = vadd.f32 %v892, %v893
        %v895 = vsel %vm750, %v842, 0.0
        %v896 = vadd.f32 %v894, %v895
        %v897 = vsel %vm750, %v843, 0.0
        %v898 = vadd.f32 %v896, %v897
        %v899 = vsel %vm750, %v844, 0.0
        %v900 = vadd.f32 %v898, %v899
        %v901 = vsel %vm750, %v845, 0.0
        %v902 = vadd.f32 %v900, %v901
        %v903 = vsel %vm750, %v846, 0.0
        %v904 = vadd.f32 %v902, %v903
        %v905 = vsel %vm750, %v847, 0.0
        %v906 = vadd.f32 %v904, %v905
        %v907 = vsel %vm750, %v848, 0.0
        %v908 = vadd.f32 %v906, %v907
        %v909 = vsel %vm750, %v849, 0.0
        %v910 = vadd.f32 %v908, %v909
        %v911 = vsel %vm750, %v850, 0.0
        %v912 = vadd.f32 %v910, %v911
        %v913 = vsel %vm750, %v851, 0.0
        %v914 = vadd.f32 %v912, %v913
        %v915 = vrot.slane %v914, 4
        %v916 = vadd.f32 %v914, %v915
        %v917 = vrot.slane %v916, 2
        %v918 = vadd.f32 %v916, %v917
        %v919 = vrot.slane %v918, 1
        %v920 = vadd.f32 %v918, %v919
        %v921 = vld [vmem:[%s231] sm:$0x3]
        %vm922 = vcmask 1040384
        %v923 = vsel %vm922, %v819, %v920
        %v924 = vadd.f32 %v921, %v923
        %vm925 = vcmask 123904
        %926 = vst.msk [vmem:[%s231] sm:$0x3] %vm925, %v924
        %s927 = sand.u32 %s96, 1
        %s928 = scalar_lea.sflag [#allocation4], %s927
        %s929 = sand.u32 %s96, 1
        %s930 = smul.addr %s929, 128
        %s931 = scalar_lea.vmem [#allocation7], %s930
        %s932 = sand.u32 %s122, 1
        %s933 = scalar_lea.sflag [#allocation9], %s932
        %s934 = sand.u32 %s122, 1
        %s935 = smul.addr %s934, 2
        %s936 = scalar_lea.vmem [#allocation8], %s935
        // Predicated region
        $region41: #{repconv_forward.2} parent=27 // pred_check
          %p937 = pneg %p106
        $region42: #{repconv_forward.2} parent=27 // pred_check_branch
          %939 = sbr.rel (%p937) target = $region44
        $region43: #{repconv_forward.2} parent=27 // pred_region
          %s940 = sadd.s32 %s29, %s30
          %s941 = smul.u32 32, %s940
          %s943 = ssub.s32 2048, 2048
          %944 = vsyncadd %s928, %s943
          %s945 = smul.addr %s941, 64
          %s946 = scalar_lea.hbm %s2, %s945
          %s947 = sshll.u32 %s931, 4
          %s948 = int_to_ptr.vmem [resolvable:$true] %s947
          %953 = dma.vmem_to_hbm [thread:$0]  %s948, 2048, %s946, %s928, 64, 64, 4
        $region44: #{repconv_forward.2} parent=27 // pred_fallthru
          _
        // Predicated region
        $region45: #{repconv_forward.2} parent=27 // pred_check
          %p954 = pneg %p132
        $region46: #{repconv_forward.2} parent=27 // pred_check_branch
          %956 = sbr.rel (%p954) target = $region48
        $region47: #{repconv_forward.2} parent=27 // pred_region
          %s958 = ssub.s32 32, 32
          %959 = vsyncadd %s933, %s958
          %s960 = smul.addr %s29, 32
          %s961 = scalar_lea.hbm %s3, %s960
          %s963 = sshll.u32 %s936, 4
          %s964 = int_to_ptr.vmem [resolvable:$true] %s963
          %966 = dma.vmem_to_hbm [thread:$0]  %s964, 32, %s961, %s933
        $region48: #{repconv_forward.2} parent=27 // pred_fallthru
          _
      $region28: #{repconv_forward.2} parent=5 // pred_fallthru
        _
      %p967 = scmp.le.s32.totalorder 2, %s20
      // Predicated region
      $region49: #{repconv_forward.2} parent=5 // pred_check
        %p968 = pneg %p967
      $region50: #{repconv_forward.2} parent=5 // pred_check_branch
        %970 = sbr.rel (%p968) target = $region52
      $region51: #{repconv_forward.2} parent=5 // pred_region
        %s971 = ssub.s32 %s20, 2
        // Predicated region
        $region53: #{repconv_forward.2} parent=51 // pred_check
          %p972 = pneg %p112
        $region54: #{repconv_forward.2} parent=51 // pred_check_branch
          %974 = sbr.rel (%p972) target = $region56
        $region55: #{repconv_forward.2} parent=51 // pred_region
          %s975 = sand.u32 %s97, 1
          %s976 = scalar_lea.sflag [#allocation4], %s975
          %s977 = sand.u32 %s97, 1
          %s978 = smul.addr %s977, 128
          %s979 = scalar_lea.vmem [#allocation7], %s978
          %980 = dma.done %s976, 2048
        $region56: #{repconv_forward.2} parent=51 // pred_fallthru
          _
        // Predicated region
        $region57: #{repconv_forward.2} parent=51 // pred_check
          %p981 = pneg %p138
        $region58: #{repconv_forward.2} parent=51 // pred_check_branch
          %983 = sbr.rel (%p981) target = $region60
        $region59: #{repconv_forward.2} parent=51 // pred_region
          %s984 = sand.u32 %s123, 1
          %s985 = scalar_lea.sflag [#allocation9], %s984
          %s986 = sand.u32 %s123, 1
          %s987 = smul.addr %s986, 2
          %s988 = scalar_lea.vmem [#allocation8], %s987
          %989 = dma.done %s985, 32
        $region60: #{repconv_forward.2} parent=51 // pred_fallthru
          _
      $region52: #{repconv_forward.2} parent=5 // pred_fallthru
        _
    $region6: #{repconv_forward.2} parent=1 // loop_footer
      %s24 = sadd.s32 1, %s20
    $region7: #{repconv_forward.2} parent=1 // loop_footer_branch
      %19 = sbr.rel target = $region3
    $region8: #{repconv_forward.2} parent=1 // loop_exit
      _
    %990 = vsyncpa [#allocation3], 1
    %s991 = scalar_lea.sflag [#allocation3], 1
    %992 = vsyncpa %s991, 1
    %993 = vsyncpa [#allocation6], 1
    %994 = vsyncpa [#allocation4], 1
    %s995 = scalar_lea.sflag [#allocation4], 1
    %996 = vsyncpa %s995, 1
    %997 = vsyncpa [#allocation9], 1
    %s998 = scalar_lea.sflag [#allocation9], 1
    %999 = vsyncpa %s998, 1

</llo_original>
